<compile_context>
chip_gen: v6e
topology: v6e:2x2x1
jax: 0.10.0
libtpu: 0.0.40
codegen_flags: <defaults>
</compile_context>

<pallas_src>
import functools

import jax
import jax.numpy as jnp
from jax.experimental import pallas as pl
from jax.experimental.pallas import tpu as pltpu


def _channel_cell_kernel(eca_b_ref,              # SMEM (2,): conv1d biases (ECA1, ECA2)
                         x1_ref, x2_ref,         # VMEM (bt*C, HW), native dtype
                         band1_ref, band2_ref,   # VMEM (C, C): banded conv1d(k=3) weights
                         w1s_ref, b1_ref,        # VMEM (4, 2C, C), (1, 2C)
                         w2_ref, b2_ref,         # VMEM (P, 2C), (1, P)
                         o1_ref, o2_ref, pp_ref, # VMEM (bt*C, HW) x2, (bt, P)
                         *, channels, batch_tile, inv_hw):
    c = channels
    bt = batch_tile

    x1 = x1_ref[...]                             # single read; native dtype for the streaming path
    x2 = x2_ref[...]

    # ---- per-(batch, channel) spatial stats: lane reduction over HW.
    # max is exact in the native dtype; the mean accumulates in f32. Only the tiny
    # per-row results are reshaped to the lane-dense (bt, C) layout used below.
    mean1 = (jnp.sum(x1, axis=-1, keepdims=True, dtype=jnp.float32) * inv_hw).reshape(bt, c)
    mean2 = (jnp.sum(x2, axis=-1, keepdims=True, dtype=jnp.float32) * inv_hw).reshape(bt, c)
    max1 = jnp.max(x1, axis=-1, keepdims=True).astype(jnp.float32).reshape(bt, c)
    max2 = jnp.max(x2, axis=-1, keepdims=True).astype(jnp.float32).reshape(bt, c)

    # ---- ECAAttention gates: Conv1d(1, 1, k=3, pad=1) over the channel axis.
    # Batched banded contraction on the VPU/XLU (exact f32; no MXU, no HIGHEST):
    #   g[b, co] = sum_ci band[co, ci] * mean[b, ci] + bias
    g1 = jnp.sum(mean1[:, None, :] * band1_ref[...][None, :, :], axis=-1) + eca_b_ref[0]
    g2 = jnp.sum(mean2[:, None, :] * band2_ref[...][None, :, :], axis=-1) + eca_b_ref[1]
    gate1 = jax.nn.sigmoid(g1).reshape(bt * c, 1)    # back to row-oriented: one gate per row
    gate2 = jax.nn.sigmoid(g2).reshape(bt * c, 1)

    # ---- streaming gate application: (bt*C, HW) * (bt*C, 1), native dtype, single store.
    o1_ref[...] = (x1 * gate1.astype(x1.dtype)).astype(o1_ref.dtype)
    o2_ref[...] = (x2 * gate2.astype(x2.dtype)).astype(o2_ref.dtype)

    # ---- Router: cat([max12, avg12]) -> Linear -> ReLU -> Linear -> relu(tanh)
    # Batched over the tile and done entirely on the VPU (4C=16, 2C=8, P tiny).
    # W1 is pre-split per input group [max1|max2|mean1|mean2] so there is no lane concat.
    h = (jnp.sum(max1[:, None, :] * w1s_ref[0][None, :, :], axis=-1)
         + jnp.sum(max2[:, None, :] * w1s_ref[1][None, :, :], axis=-1)
         + jnp.sum(mean1[:, None, :] * w1s_ref[2][None, :, :], axis=-1)
         + jnp.sum(mean2[:, None, :] * w1s_ref[3][None, :, :], axis=-1)
         + b1_ref[...])                                                        # (bt, 2C)
    h = jnp.maximum(h, 0.0)
    logits = jnp.sum(h[:, None, :] * w2_ref[...][None, :, :], axis=-1) + b2_ref[...]  # (bt, P)
    pp_ref[...] = jnp.maximum(jnp.tanh(logits), 0.0).astype(pp_ref.dtype)     # lane-dense store


def _pick_batch_tile(b, c, hw, itemsize, *, vmem_budget=20 << 20, target_rows=1024):
    """Batch elements per grid step.

    Preferences (in order): 2-in + 2-out double-buffered slab fits a v7x-safe VMEM
    budget; bt*C is a multiple of 8 (sublane-packed, BlockSpec-legal) unless bt == B;
    tiles as large as possible (target ~1024 rows to amortize per-step overhead);
    keep >= 2 grid steps when possible so ("parallel",) can use both v7x TensorCores.
    """
    best = None
    for bt in range(1, b + 1):
        if b % bt:
            continue
        rows = bt * c
        if rows % 8 and bt != b:
            continue
        fits = 8 * rows * hw * itemsize <= vmem_budget
        score = (fits, min(rows, target_rows), (b // bt) >= 2, -rows)
        if best is None or score > best[0]:
            best = (score, bt)
    return best[1]


def channel_cell(x1, x2, params):
    """x1, x2: (B, C, H, W) with C == embed_size. Returns (out1, out2, path_prob)."""
    b, c, h, w = x1.shape
    assert x2.shape == x1.shape
    hw = h * w
    p = params
    num_out_path = p["w2"].shape[0]
    dtype = x1.dtype

    # Flatten to (B*C, HW): sublane axis = batch*channel rows, lane axis = HW
    # (256 here, a multiple of 128) -> unpadded HBM layout, unmasked vld/vst.
    x1r = x1.reshape(b * c, hw)
    x2r = x2.reshape(b * c, hw)

    bt = _pick_batch_tile(b, c, hw, x1.dtype.itemsize)
    steps = b // bt
    rows = bt * c
    # TODO(synk): if C*HW ever grows past the single-slab VMEM budget even at bt=1, add an
    # HW tile axis (stats pass + gate pass, inner axis "arbitrary") instead of full-row slabs.

    def band(wk):
        # band[c_out, c_in] s.t. sum_ci band[c_out,c_in]*m[ci] = w0*m[c-1]+w1*m[c]+w2*m[c+1] (zero pad)
        wk = wk.reshape(3).astype(jnp.float32)
        return (wk[0] * jnp.eye(c, k=-1, dtype=jnp.float32)
                + wk[1] * jnp.eye(c, dtype=jnp.float32)
                + wk[2] * jnp.eye(c, k=1, dtype=jnp.float32))

    band1 = band(p["eca1_w"])
    band2 = band(p["eca2_w"])
    eca_b = jnp.stack([p["eca1_b"].reshape(()),
                       p["eca2_b"].reshape(())]).astype(jnp.float32)          # (2,)

    # Router weights, PyTorch (out, in) layout. Pre-split W1 by input group.
    w1 = p["w1"].astype(jnp.float32)                                          # (2C, 4C)
    w1s = jnp.stack([w1[:, 0 * c:1 * c], w1[:, 1 * c:2 * c],
                     w1[:, 2 * c:3 * c], w1[:, 3 * c:4 * c]], axis=0)         # (4, 2C, C)
    b1 = p["b1"].reshape(1, -1).astype(jnp.float32)                           # (1, 2C)
    w2 = p["w2"].astype(jnp.float32)                                          # (P, 2C)
    b2 = p["b2"].reshape(1, -1).astype(jnp.float32)                           # (1, P)

    # Whole-array resident constants: allocated once in VMEM, no per-step pipelining.
    vmem_const = pl.BlockSpec(memory_space=pltpu.MemorySpace.VMEM)

    kernel = functools.partial(_channel_cell_kernel,
                               channels=c, batch_tile=bt, inv_hw=1.0 / hw)

    cost = pl.CostEstimate(
        flops=6 * b * c * hw,                          # reduce + max + gate mul, for both tensors
        transcendentals=b * (2 * c + num_out_path),    # 2C sigmoids + P tanh per batch element
        bytes_accessed=4 * b * c * hw * x1.dtype.itemsize)   # 2 reads + 2 writes

    out1, out2, pp = pl.pallas_call(
        kernel,
        out_shape=(
            jax.ShapeDtypeStruct((b * c, hw), dtype),
            jax.ShapeDtypeStruct((b * c, hw), dtype),
            jax.ShapeDtypeStruct((steps, bt, num_out_path), jnp.float32),
        ),
        grid_spec=pltpu.PrefetchScalarGridSpec(
            num_scalar_prefetch=0,
            grid=(steps,),
            in_specs=[
                pl.BlockSpec(memory_space=pltpu.MemorySpace.SMEM),   # eca conv biases (2 scalars)
                pl.BlockSpec((rows, hw), lambda i: (i, 0)),          # x1 row slab
                pl.BlockSpec((rows, hw), lambda i: (i, 0)),          # x2 row slab
                vmem_const,   # band1
                vmem_const,   # band2
                vmem_const,   # w1s
                vmem_const,   # b1
                vmem_const,   # w2
                vmem_const,   # b2
            ],
            out_specs=[
                pl.BlockSpec((rows, hw), lambda i: (i, 0)),
                pl.BlockSpec((rows, hw), lambda i: (i, 0)),
                pl.BlockSpec((None, bt, num_out_path), lambda i: (i, 0, 0)),  # (bt, P) lane-dense
            ],
        ),
        compiler_params=pltpu.CompilerParams(
            dimension_semantics=("parallel",)),
        cost_estimate=cost,
    )(eca_b, x1r, x2r, band1, band2, w1s, b1, w2, b2)

    return (out1.reshape(b, c, h, w),
            out2.reshape(b, c, h, w),
            pp.reshape(b, num_out_path))


def _reference(x1, x2, params):
    """Pure-JAX transcription of ChannelCell.forward, for verification."""
    p = params
    x1f = x1.astype(jnp.float32)
    x2f = x2.astype(jnp.float32)

    def eca(xf, wk, bias):
        m = jnp.mean(xf, axis=(2, 3))                 # (B, C)
        mp = jnp.pad(m, ((0, 0), (1, 1)))
        wk = wk.reshape(3)
        y = wk[0] * mp[:, :-2] + wk[1] * mp[:, 1:-1] + wk[2] * mp[:, 2:] + bias.reshape(())
        g = jax.nn.sigmoid(y)
        return xf * g[:, :, None, None]

    o1 = eca(x1f, p["eca1_w"], p["eca1_b"])
    o2 = eca(x2f, p["eca2_w"], p["eca2_b"])

    avg12 = jnp.concatenate([jnp.mean(x1f, axis=(2, 3)), jnp.mean(x2f, axis=(2, 3))], axis=1)
    max12 = jnp.concatenate([jnp.max(x1f, axis=(2, 3)), jnp.max(x2f, axis=(2, 3))], axis=1)
    feat = jnp.concatenate([max12, avg12], axis=1)    # (B, 4C)
    h = jnp.maximum(jnp.dot(feat, p["w1"].T, precision=jax.lax.Precision.HIGHEST) + p["b1"], 0.0)
    logits = jnp.dot(h, p["w2"].T, precision=jax.lax.Precision.HIGHEST) + p["b2"]
    pp = jnp.maximum(jnp.tanh(logits), 0.0)
    return o1.astype(x1.dtype), o2.astype(x2.dtype), pp


if __name__ == "__main__":
    B, E, H, W = 2, 4, 16, 16     # embed_size=4, spatial 16x16 (H*W=256 -> lane-dense)
    P = 4                          # num_out_path

    key = jax.random.PRNGKey(0)
    k = jax.random.split(key, 9)

    x1 = jax.random.normal(k[0], (B, E, H, W), dtype=jnp.float32)
    x2 = jax.random.normal(k[1], (B, E, H, W), dtype=jnp.float32)

    params = {
        "eca1_w": 0.5 * jax.random.normal(k[2], (3,), dtype=jnp.float32),
        "eca1_b": 0.1 * jax.random.normal(k[3], (1,), dtype=jnp.float32),
        "eca2_w": 0.5 * jax.random.normal(k[4], (3,), dtype=jnp.float32),
        "eca2_b": 0.1 * jax.random.normal(k[5], (1,), dtype=jnp.float32),
        "w1": 0.2 * jax.random.normal(k[6], (2 * E, 4 * E), dtype=jnp.float32),
        "b1": 0.1 * jax.random.normal(k[7], (2 * E,), dtype=jnp.float32),
        "w2": 0.2 * jax.random.normal(k[8], (P, 2 * E), dtype=jnp.float32),
        "b2": jnp.full((P,), 1.5, dtype=jnp.float32),   # Router.init_weights fills bias=1.5
    }

    out1, out2, pp = channel_cell(x1, x2, params)
    out1, out2, pp = jax.block_until_ready((out1, out2, pp))

    r1, r2, rp = _reference(x1, x2, params)
    assert out1.shape == (B, E, H, W) and out2.shape == (B, E, H, W)
    assert pp.shape == (B, P)
    assert jnp.allclose(out1, r1, atol=1e-5, rtol=1e-5), "esa_emb1 mismatch vs reference"
    assert jnp.allclose(out2, r2, atol=1e-5, rtol=1e-5), "esa_emb2 mismatch vs reference"
    assert jnp.allclose(pp, rp, atol=1e-5, rtol=1e-5), "path_prob mismatch vs reference"

    print("KERNEL_OK")
</pallas_src>

<mosaic_0001>
module attributes {stable_mosaic.version = 11 : i64} {
  func.func @_channel_cell_kernel(%arg0: i32, %arg1: memref<2xf32, #tpu.memory_space<smem>>, %arg2: memref<8x256xf32, #tpu.memory_space<vmem>>, %arg3: memref<8x256xf32, #tpu.memory_space<vmem>>, %arg4: memref<4x4xf32, #tpu.memory_space<vmem>>, %arg5: memref<4x4xf32, #tpu.memory_space<vmem>>, %arg6: memref<4x8x4xf32, #tpu.memory_space<vmem>>, %arg7: memref<1x8xf32, #tpu.memory_space<vmem>>, %arg8: memref<4x8xf32, #tpu.memory_space<vmem>>, %arg9: memref<1x4xf32, #tpu.memory_space<vmem>>, %arg10: memref<8x256xf32, #tpu.memory_space<vmem>>, %arg11: memref<8x256xf32, #tpu.memory_space<vmem>>, %arg12: memref<1x2x4xf32, #tpu.memory_space<vmem>>) attributes {dimension_semantics = [#tpu.dimension_semantics<parallel>], iteration_bounds = array<i64: 1>, scalar_prefetch = 0 : i64, scratch_operands = 0 : i64, tpu.core_type = #tpu.core_type<tc>, window_params = [{transform_indices = @transform_0, window_bounds = array<i64: 2>}, {transform_indices = @transform_1, window_bounds = array<i64: 8, 256>}, {transform_indices = @transform_2, window_bounds = array<i64: 8, 256>}, {pipeline_mode = #tpu.pipeline_mode<synchronous>, transform_indices = @transform_3, window_bounds = array<i64: 4, 4>}, {pipeline_mode = #tpu.pipeline_mode<synchronous>, transform_indices = @transform_4, window_bounds = array<i64: 4, 4>}, {pipeline_mode = #tpu.pipeline_mode<synchronous>, transform_indices = @transform_5, window_bounds = array<i64: 4, 8, 4>}, {pipeline_mode = #tpu.pipeline_mode<synchronous>, transform_indices = @transform_6, window_bounds = array<i64: 1, 8>}, {pipeline_mode = #tpu.pipeline_mode<synchronous>, transform_indices = @transform_7, window_bounds = array<i64: 4, 8>}, {pipeline_mode = #tpu.pipeline_mode<synchronous>, transform_indices = @transform_8, window_bounds = array<i64: 1, 4>}, {transform_indices = @transform_9, window_bounds = array<i64: 8, 256>}, {transform_indices = @transform_10, window_bounds = array<i64: 8, 256>}, {transform_indices = @transform_11, window_bounds = array<i64: 1, 2, 4>}]} {
    %c0 = arith.constant 0 : index
    %c0_0 = arith.constant 0 : index
    %0 = vector.load %arg2[%c0, %c0_0] : memref<8x256xf32, #tpu.memory_space<vmem>>, vector<8x256xf32>
    %c0_1 = arith.constant 0 : index
    %c0_2 = arith.constant 0 : index
    %1 = vector.load %arg3[%c0_1, %c0_2] : memref<8x256xf32, #tpu.memory_space<vmem>>, vector<8x256xf32>
    %cst = arith.constant dense<0.000000e+00> : vector<8xf32>
    %2 = vector.multi_reduction <add>, %0, %cst [1] : vector<8x256xf32> to vector<8xf32>
    %3 = vector.shape_cast %2 : vector<8xf32> to vector<8x1xf32>
    %cst_3 = arith.constant 3.906250e-03 : f32
    %4 = vector.broadcast %cst_3 : f32 to vector<8x1xf32>
    %5 = arith.mulf %3, %4 : vector<8x1xf32>
    %6 = vector.shape_cast %5 : vector<8x1xf32> to vector<2x4xf32>
    %cst_4 = arith.constant dense<0.000000e+00> : vector<8xf32>
    %7 = vector.multi_reduction <add>, %1, %cst_4 [1] : vector<8x256xf32> to vector<8xf32>
    %8 = vector.shape_cast %7 : vector<8xf32> to vector<8x1xf32>
    %cst_5 = arith.constant 3.906250e-03 : f32
    %9 = vector.broadcast %cst_5 : f32 to vector<8x1xf32>
    %10 = arith.mulf %8, %9 : vector<8x1xf32>
    %11 = vector.shape_cast %10 : vector<8x1xf32> to vector<2x4xf32>
    %cst_6 = arith.constant dense<0xFF800000> : vector<8xf32>
    %12 = vector.multi_reduction <maximumf>, %0, %cst_6 [1] : vector<8x256xf32> to vector<8xf32>
    %13 = vector.shape_cast %12 : vector<8xf32> to vector<8x1xf32>
    %14 = vector.shape_cast %13 : vector<8x1xf32> to vector<2x4xf32>
    %cst_7 = arith.constant dense<0xFF800000> : vector<8xf32>
    %15 = vector.multi_reduction <maximumf>, %1, %cst_7 [1] : vector<8x256xf32> to vector<8xf32>
    %16 = vector.shape_cast %15 : vector<8xf32> to vector<8x1xf32>
    %17 = vector.shape_cast %16 : vector<8x1xf32> to vector<2x4xf32>
    %18 = vector.shape_cast %6 : vector<2x4xf32> to vector<2x1x4xf32>
    %c0_8 = arith.constant 0 : index
    %c0_9 = arith.constant 0 : index
    %19 = vector.load %arg4[%c0_8, %c0_9] : memref<4x4xf32, #tpu.memory_space<vmem>>, vector<4x4xf32>
    %20 = vector.shape_cast %19 : vector<4x4xf32> to vector<1x4x4xf32>
    %21 = vector.broadcast %18 : vector<2x1x4xf32> to vector<2x4x4xf32>
    %22 = vector.broadcast %20 : vector<1x4x4xf32> to vector<2x4x4xf32>
    %23 = arith.mulf %21, %22 : vector<2x4x4xf32>
    %cst_10 = arith.constant dense<0.000000e+00> : vector<2x4xf32>
    %24 = vector.multi_reduction <add>, %23, %cst_10 [2] : vector<2x4x4xf32> to vector<2x4xf32>
    %c0_11 = arith.constant 0 : index
    %25 = memref.load %arg1[%c0_11] : memref<2xf32, #tpu.memory_space<smem>>
    %26 = vector.broadcast %25 : f32 to vector<2x4xf32>
    %27 = arith.addf %24, %26 : vector<2x4xf32>
    %28 = vector.shape_cast %11 : vector<2x4xf32> to vector<2x1x4xf32>
    %c0_12 = arith.constant 0 : index
    %c0_13 = arith.constant 0 : index
    %29 = vector.load %arg5[%c0_12, %c0_13] : memref<4x4xf32, #tpu.memory_space<vmem>>, vector<4x4xf32>
    %30 = vector.shape_cast %29 : vector<4x4xf32> to vector<1x4x4xf32>
    %31 = vector.broadcast %28 : vector<2x1x4xf32> to vector<2x4x4xf32>
    %32 = vector.broadcast %30 : vector<1x4x4xf32> to vector<2x4x4xf32>
    %33 = arith.mulf %31, %32 : vector<2x4x4xf32>
    %cst_14 = arith.constant dense<0.000000e+00> : vector<2x4xf32>
    %34 = vector.multi_reduction <add>, %33, %cst_14 [2] : vector<2x4x4xf32> to vector<2x4xf32>
    %c1 = arith.constant 1 : index
    %35 = memref.load %arg1[%c1] : memref<2xf32, #tpu.memory_space<smem>>
    %36 = vector.broadcast %35 : f32 to vector<2x4xf32>
    %37 = arith.addf %34, %36 : vector<2x4xf32>
    %38 = arith.negf %27 : vector<2x4xf32>
    %39 = math.exp %38 : vector<2x4xf32>
    %cst_15 = arith.constant 1.000000e+00 : f32
    %40 = vector.broadcast %cst_15 : f32 to vector<2x4xf32>
    %41 = arith.addf %40, %39 : vector<2x4xf32>
    %42 = arith.divf %40, %41 : vector<2x4xf32>
    %43 = vector.shape_cast %42 : vector<2x4xf32> to vector<8x1xf32>
    %44 = arith.negf %37 : vector<2x4xf32>
    %45 = math.exp %44 : vector<2x4xf32>
    %cst_16 = arith.constant 1.000000e+00 : f32
    %46 = vector.broadcast %cst_16 : f32 to vector<2x4xf32>
    %47 = arith.addf %46, %45 : vector<2x4xf32>
    %48 = arith.divf %46, %47 : vector<2x4xf32>
    %49 = vector.shape_cast %48 : vector<2x4xf32> to vector<8x1xf32>
    %50 = vector.broadcast %43 : vector<8x1xf32> to vector<8x256xf32>
    %51 = arith.mulf %0, %50 : vector<8x256xf32>
    %c0_17 = arith.constant 0 : index
    %c0_18 = arith.constant 0 : index
    %52 = vector.load %arg10[%c0_17, %c0_18] : memref<8x256xf32, #tpu.memory_space<vmem>>, vector<8x256xf32>
    tpu.vector_store %arg10[%c0_17, %c0_18], %51 {strides = array<i32>} : memref<8x256xf32, #tpu.memory_space<vmem>>, vector<8x256xf32>,
    %53 = vector.broadcast %49 : vector<8x1xf32> to vector<8x256xf32>
    %54 = arith.mulf %1, %53 : vector<8x256xf32>
    %c0_19 = arith.constant 0 : index
    %c0_20 = arith.constant 0 : index
    %55 = vector.load %arg11[%c0_19, %c0_20] : memref<8x256xf32, #tpu.memory_space<vmem>>, vector<8x256xf32>
    tpu.vector_store %arg11[%c0_19, %c0_20], %54 {strides = array<i32>} : memref<8x256xf32, #tpu.memory_space<vmem>>, vector<8x256xf32>,
    %56 = vector.shape_cast %14 : vector<2x4xf32> to vector<2x1x4xf32>
    %c0_21 = arith.constant 0 : index
    %c0_22 = arith.constant 0 : index
    %c0_23 = arith.constant 0 : index
    %57 = vector.load %arg6[%c0_21, %c0_22, %c0_23] : memref<4x8x4xf32, #tpu.memory_space<vmem>>, vector<1x8x4xf32>
    %58 = vector.shape_cast %57 : vector<1x8x4xf32> to vector<8x4xf32>
    %59 = vector.shape_cast %58 : vector<8x4xf32> to vector<1x8x4xf32>
    %60 = vector.broadcast %56 : vector<2x1x4xf32> to vector<2x8x4xf32>
    %61 = vector.broadcast %59 : vector<1x8x4xf32> to vector<2x8x4xf32>
    %62 = arith.mulf %60, %61 : vector<2x8x4xf32>
    %cst_24 = arith.constant dense<0.000000e+00> : vector<2x8xf32>
    %63 = vector.multi_reduction <add>, %62, %cst_24 [2] : vector<2x8x4xf32> to vector<2x8xf32>
    %64 = vector.shape_cast %17 : vector<2x4xf32> to vector<2x1x4xf32>
    %c1_25 = arith.constant 1 : index
    %c0_26 = arith.constant 0 : index
    %c0_27 = arith.constant 0 : index
    %65 = vector.load %arg6[%c1_25, %c0_26, %c0_27] : memref<4x8x4xf32, #tpu.memory_space<vmem>>, vector<1x8x4xf32>
    %66 = vector.shape_cast %65 : vector<1x8x4xf32> to vector<8x4xf32>
    %67 = vector.shape_cast %66 : vector<8x4xf32> to vector<1x8x4xf32>
    %68 = vector.broadcast %64 : vector<2x1x4xf32> to vector<2x8x4xf32>
    %69 = vector.broadcast %67 : vector<1x8x4xf32> to vector<2x8x4xf32>
    %70 = arith.mulf %68, %69 : vector<2x8x4xf32>
    %cst_28 = arith.constant dense<0.000000e+00> : vector<2x8xf32>
    %71 = vector.multi_reduction <add>, %70, %cst_28 [2] : vector<2x8x4xf32> to vector<2x8xf32>
    %72 = arith.addf %63, %71 : vector<2x8xf32>
    %73 = vector.shape_cast %6 : vector<2x4xf32> to vector<2x1x4xf32>
    %c2 = arith.constant 2 : index
    %c0_29 = arith.constant 0 : index
    %c0_30 = arith.constant 0 : index
    %74 = vector.load %arg6[%c2, %c0_29, %c0_30] : memref<4x8x4xf32, #tpu.memory_space<vmem>>, vector<1x8x4xf32>
    %75 = vector.shape_cast %74 : vector<1x8x4xf32> to vector<8x4xf32>
    %76 = vector.shape_cast %75 : vector<8x4xf32> to vector<1x8x4xf32>
    %77 = vector.broadcast %73 : vector<2x1x4xf32> to vector<2x8x4xf32>
    %78 = vector.broadcast %76 : vector<1x8x4xf32> to vector<2x8x4xf32>
    %79 = arith.mulf %77, %78 : vector<2x8x4xf32>
    %cst_31 = arith.constant dense<0.000000e+00> : vector<2x8xf32>
    %80 = vector.multi_reduction <add>, %79, %cst_31 [2] : vector<2x8x4xf32> to vector<2x8xf32>
    %81 = arith.addf %72, %80 : vector<2x8xf32>
    %82 = vector.shape_cast %11 : vector<2x4xf32> to vector<2x1x4xf32>
    %c3 = arith.constant 3 : index
    %c0_32 = arith.constant 0 : index
    %c0_33 = arith.constant 0 : index
    %83 = vector.load %arg6[%c3, %c0_32, %c0_33] : memref<4x8x4xf32, #tpu.memory_space<vmem>>, vector<1x8x4xf32>
    %84 = vector.shape_cast %83 : vector<1x8x4xf32> to vector<8x4xf32>
    %85 = vector.shape_cast %84 : vector<8x4xf32> to vector<1x8x4xf32>
    %86 = vector.broadcast %82 : vector<2x1x4xf32> to vector<2x8x4xf32>
    %87 = vector.broadcast %85 : vector<1x8x4xf32> to vector<2x8x4xf32>
    %88 = arith.mulf %86, %87 : vector<2x8x4xf32>
    %cst_34 = arith.constant dense<0.000000e+00> : vector<2x8xf32>
    %89 = vector.multi_reduction <add>, %88, %cst_34 [2] : vector<2x8x4xf32> to vector<2x8xf32>
    %90 = arith.addf %81, %89 : vector<2x8xf32>
    %c0_35 = arith.constant 0 : index
    %c0_36 = arith.constant 0 : index
    %91 = vector.load %arg7[%c0_35, %c0_36] : memref<1x8xf32, #tpu.memory_space<vmem>>, vector<1x8xf32>
    %92 = vector.broadcast %91 : vector<1x8xf32> to vector<2x8xf32>
    %93 = arith.addf %90, %92 : vector<2x8xf32>
    %cst_37 = arith.constant 0.000000e+00 : f32
    %94 = vector.broadcast %cst_37 : f32 to vector<2x8xf32>
    %95 = arith.maximumf %93, %94 : vector<2x8xf32>
    %96 = vector.shape_cast %95 : vector<2x8xf32> to vector<2x1x8xf32>
    %c0_38 = arith.constant 0 : index
    %c0_39 = arith.constant 0 : index
    %97 = vector.load %arg8[%c0_38, %c0_39] : memref<4x8xf32, #tpu.memory_space<vmem>>, vector<4x8xf32>
    %98 = vector.shape_cast %97 : vector<4x8xf32> to vector<1x4x8xf32>
    %99 = vector.broadcast %96 : vector<2x1x8xf32> to vector<2x4x8xf32>
    %100 = vector.broadcast %98 : vector<1x4x8xf32> to vector<2x4x8xf32>
    %101 = arith.mulf %99, %100 : vector<2x4x8xf32>
    %cst_40 = arith.constant dense<0.000000e+00> : vector<2x4xf32>
    %102 = vector.multi_reduction <add>, %101, %cst_40 [2] : vector<2x4x8xf32> to vector<2x4xf32>
    %c0_41 = arith.constant 0 : index
    %c0_42 = arith.constant 0 : index
    %103 = vector.load %arg9[%c0_41, %c0_42] : memref<1x4xf32, #tpu.memory_space<vmem>>, vector<1x4xf32>
    %104 = vector.broadcast %103 : vector<1x4xf32> to vector<2x4xf32>
    %105 = arith.addf %102, %104 : vector<2x4xf32>
    %106 = math.tanh %105 : vector<2x4xf32>
    %cst_43 = arith.constant 0.000000e+00 : f32
    %107 = vector.broadcast %cst_43 : f32 to vector<2x4xf32>
    %108 = arith.maximumf %106, %107 : vector<2x4xf32>
    %c0_44 = arith.constant 0 : index
    %c0_45 = arith.constant 0 : index
    %c0_46 = arith.constant 0 : index
    %109 = vector.load %arg12[%c0_44, %c0_45, %c0_46] : memref<1x2x4xf32, #tpu.memory_space<vmem>>, vector<1x2x4xf32>
    %110 = vector.shape_cast %109 : vector<1x2x4xf32> to vector<2x4xf32>
    %111 = vector.shape_cast %108 : vector<2x4xf32> to vector<1x2x4xf32>
    tpu.vector_store %arg12[%c0_44, %c0_45, %c0_46], %111 {strides = array<i32>} : memref<1x2x4xf32, #tpu.memory_space<vmem>>, vector<1x2x4xf32>,
    return
  }
  func.func @transform_0(%arg0: i32) -> i32 {
    %c0_i32 = arith.constant 0 : i32
    %c0_i32_0 = arith.constant 0 : i32
    return %c0_i32 : i32
  }
  func.func @transform_1(%arg0: i32) -> (i32, i32) {
    %c0_i32 = arith.constant 0 : i32
    %c0_i32_0 = arith.constant 0 : i32
    return %arg0, %c0_i32 : i32, i32
  }
  func.func @transform_2(%arg0: i32) -> (i32, i32) {
    %c0_i32 = arith.constant 0 : i32
    %c0_i32_0 = arith.constant 0 : i32
    return %arg0, %c0_i32 : i32, i32
  }
  func.func @transform_3(%arg0: i32) -> (i32, i32) {
    %c0_i32 = arith.constant 0 : i32
    %c0_i32_0 = arith.constant 0 : i32
    %c0_i32_1 = arith.constant 0 : i32
    return %c0_i32, %c0_i32_0 : i32, i32
  }
  func.func @transform_4(%arg0: i32) -> (i32, i32) {
    %c0_i32 = arith.constant 0 : i32
    %c0_i32_0 = arith.constant 0 : i32
    %c0_i32_1 = arith.constant 0 : i32
    return %c0_i32, %c0_i32_0 : i32, i32
  }
  func.func @transform_5(%arg0: i32) -> (i32, i32, i32) {
    %c0_i32 = arith.constant 0 : i32
    %c0_i32_0 = arith.constant 0 : i32
    %c0_i32_1 = arith.constant 0 : i32
    %c0_i32_2 = arith.constant 0 : i32
    return %c0_i32, %c0_i32_0, %c0_i32_1 : i32, i32, i32
  }
  func.func @transform_6(%arg0: i32) -> (i32, i32) {
    %c0_i32 = arith.constant 0 : i32
    %c0_i32_0 = arith.constant 0 : i32
    %c0_i32_1 = arith.constant 0 : i32
    return %c0_i32, %c0_i32_0 : i32, i32
  }
  func.func @transform_7(%arg0: i32) -> (i32, i32) {
    %c0_i32 = arith.constant 0 : i32
    %c0_i32_0 = arith.constant 0 : i32
    %c0_i32_1 = arith.constant 0 : i32
    return %c0_i32, %c0_i32_0 : i32, i32
  }
  func.func @transform_8(%arg0: i32) -> (i32, i32) {
    %c0_i32 = arith.constant 0 : i32
    %c0_i32_0 = arith.constant 0 : i32
    %c0_i32_1 = arith.constant 0 : i32
    return %c0_i32, %c0_i32_0 : i32, i32
  }
  func.func @transform_9(%arg0: i32) -> (i32, i32) {
    %c0_i32 = arith.constant 0 : i32
    %c0_i32_0 = arith.constant 0 : i32
    return %arg0, %c0_i32 : i32, i32
  }
  func.func @transform_10(%arg0: i32) -> (i32, i32) {
    %c0_i32 = arith.constant 0 : i32
    %c0_i32_0 = arith.constant 0 : i32
    return %arg0, %c0_i32 : i32, i32
  }
  func.func @transform_11(%arg0: i32) -> (i32, i32, i32) {
    %c0_i32 = arith.constant 0 : i32
    %c0_i32_0 = arith.constant 0 : i32
    %c0_i32_1 = arith.constant 0 : i32
    return %arg0, %c0_i32, %c0_i32_0 : i32, i32, i32
  }
}

</mosaic_0001>

<llo_original>
// kernel: tpu_custom_call.1
$region0: #{tpu_custom_call.1}
  #allocation0 [shape = 'u32[]', space=smem, size = 0x4, offset = 0x4, fixed_abs, tag = 'smem constant byte address 0x4 - core index']
  #allocation1 [shape = 'u32[144,128]{1,0:T(1,128)}', space=vmem, size = 0x12000, scoped, tag = 'internal scratch']
  %s0 = inlined_call_operand.vmem [shape: f32[2], index: 0, kind: input, shape index: {}]
  %s1 = inlined_call_operand.vmem [shape: f32[8,256], index: 1, kind: input, shape index: {}]
  %s2 = inlined_call_operand.vmem [shape: f32[8,256], index: 2, kind: input, shape index: {}]
  %s3 = inlined_call_operand.vmem [shape: f32[4,4], index: 3, kind: input, shape index: {}]
  %s4 = inlined_call_operand.vmem [shape: f32[4,4], index: 4, kind: input, shape index: {}]
  %s5 = inlined_call_operand.vmem [shape: f32[4,8,4], index: 5, kind: input, shape index: {}]
  %s6 = inlined_call_operand.vmem [shape: f32[1,8], index: 6, kind: input, shape index: {}]
  %s7 = inlined_call_operand.vmem [shape: f32[4,8], index: 7, kind: input, shape index: {}]
  %s8 = inlined_call_operand.vmem [shape: f32[1,4], index: 8, kind: input, shape index: {}]
  %s9 = inlined_call_operand.hbm [shape: f32[8,256], index: 9, kind: output, shape index: {0}]
  %s10 = inlined_call_operand.hbm [shape: f32[8,256], index: 10, kind: output, shape index: {1}]
  %s11 = inlined_call_operand.hbm [shape: f32[1,2,4], index: 11, kind: output, shape index: {2}]
  %12 = xla_tuple %s9, %s10, %s11
  %s13 = sld [smem:[#allocation0]]
  $region66: #{tpu_custom_call.1} parent=0
    _
  %s15 = ssub.s32 1, %s13
  %s16 = scalar_select 0, %s15, %s13
  $region1: #{tpu_custom_call.1} parent=0
    #allocation2 [shape = 'u8[512]{0}', space=smem, size = 0x200, scoped, tag = 'input window, operand 0, single buffered']
    #allocation3 [shape = 's32[1]{0}', space=sflag, size = 0x4, scoped, tag = 'scoped memory for tpu_custom_call.1']
    #allocation4 [shape = 's32[1]{0}', space=sflag, size = 0x4, scoped, tag = 'scoped memory for tpu_custom_call.1']
    #allocation5 [shape = 'u8[8192]{0}', space=vmem, size = 0x2000, scoped, tag = 'output window, operand 0, single buffered']
    #allocation6 [shape = 'u8[8192]{0}', space=vmem, size = 0x2000, scoped, tag = 'output window, operand 1, single buffered']
    #allocation7 [shape = 's32[1]{0}', space=sflag, size = 0x4, scoped, tag = 'scoped memory for tpu_custom_call.1']
    #allocation8 [shape = 'u8[1024]{0}', space=vmem, size = 0x400, scoped, tag = 'output window, operand 2, single buffered']
    %17 = vsyncpa [#allocation4], 0
    %18 = vsyncpa [#allocation3], 0
    %19 = vsyncpa [#allocation7], 0
    // Predicated region
    $region2: #{tpu_custom_call.1} parent=1 // pred_check
      _
    $region3: #{tpu_custom_call.1} parent=1 // pred_check_branch
      %21 = sbr.rel (0) target = $region5
    $region4: #{tpu_custom_call.1} parent=1 // pred_region
      %s23 = ssub.s32 16, 16
      %24 = vsyncadd [#allocation4], %s23
      %s26 = sshll.u32 %s0, 4
      %s27 = int_to_ptr.vmem [resolvable:$true] %s26
      %29 = dma.vmem_to_smem %s27, 16, [#allocation2], [#allocation4]
    $region5: #{tpu_custom_call.1} parent=1 // pred_fallthru
      _
    // Predicated region
    $region6: #{tpu_custom_call.1} parent=1 // pred_check
      _
    $region7: #{tpu_custom_call.1} parent=1 // pred_check_branch
      %31 = sbr.rel (0) target = $region9
    $region8: #{tpu_custom_call.1} parent=1 // pred_region
      _
    $region9: #{tpu_custom_call.1} parent=1 // pred_fallthru
      _
    // Predicated region
    $region10: #{tpu_custom_call.1} parent=1 // pred_check
      _
    $region11: #{tpu_custom_call.1} parent=1 // pred_check_branch
      %33 = sbr.rel (0) target = $region13
    $region12: #{tpu_custom_call.1} parent=1 // pred_region
      _
    $region13: #{tpu_custom_call.1} parent=1 // pred_fallthru
      _
    // Predicated region
    $region14: #{tpu_custom_call.1} parent=1 // pred_check
      _
    $region15: #{tpu_custom_call.1} parent=1 // pred_check_branch
      %35 = sbr.rel (0) target = $region17
    $region16: #{tpu_custom_call.1} parent=1 // pred_region
      _
    $region17: #{tpu_custom_call.1} parent=1 // pred_fallthru
      _
    // Predicated region
    $region18: #{tpu_custom_call.1} parent=1 // pred_check
      _
    $region19: #{tpu_custom_call.1} parent=1 // pred_check_branch
      %37 = sbr.rel (0) target = $region21
    $region20: #{tpu_custom_call.1} parent=1 // pred_region
      _
    $region21: #{tpu_custom_call.1} parent=1 // pred_fallthru
      _
    // Predicated region
    $region22: #{tpu_custom_call.1} parent=1 // pred_check
      _
    $region23: #{tpu_custom_call.1} parent=1 // pred_check_branch
      %39 = sbr.rel (0) target = $region25
    $region24: #{tpu_custom_call.1} parent=1 // pred_region
      _
    $region25: #{tpu_custom_call.1} parent=1 // pred_fallthru
      _
    // Predicated region
    $region26: #{tpu_custom_call.1} parent=1 // pred_check
      _
    $region27: #{tpu_custom_call.1} parent=1 // pred_check_branch
      %41 = sbr.rel (0) target = $region29
    $region28: #{tpu_custom_call.1} parent=1 // pred_region
      _
    $region29: #{tpu_custom_call.1} parent=1 // pred_fallthru
      _
    // Predicated region
    $region30: #{tpu_custom_call.1} parent=1 // pred_check
      _
    $region31: #{tpu_custom_call.1} parent=1 // pred_check_branch
      %43 = sbr.rel (0) target = $region33
    $region32: #{tpu_custom_call.1} parent=1 // pred_region
      _
    $region33: #{tpu_custom_call.1} parent=1 // pred_fallthru
      _
    // Predicated region
    $region34: #{tpu_custom_call.1} parent=1 // pred_check
      _
    $region35: #{tpu_custom_call.1} parent=1 // pred_check_branch
      %45 = sbr.rel (0) target = $region37
    $region36: #{tpu_custom_call.1} parent=1 // pred_region
      _
    $region37: #{tpu_custom_call.1} parent=1 // pred_fallthru
      _
    // Predicated region
    $region38: #{tpu_custom_call.1} parent=1 // pred_check
      _
    $region39: #{tpu_custom_call.1} parent=1 // pred_check_branch
      %47 = sbr.rel (0) target = $region41
    $region40: #{tpu_custom_call.1} parent=1 // pred_region
      %48 = dma.done [#allocation4], 16
    $region41: #{tpu_custom_call.1} parent=1 // pred_fallthru
      _
    %49 = sfence
    %v50 = vld [vmem:[%s1] sm:$0xff]
    %v51 = vld [vmem:[%s1 + $0x8] sm:$0xff]
    %v52 = vld [vmem:[%s2] sm:$0xff]
    %v53 = vld [vmem:[%s2 + $0x8] sm:$0xff]
    %v54 = vadd.f32 %v50, %v51
    %55 = vadd.xlane.f32.xlu0 %v54
    %v56 = vpop.xlane.xlu0 %55
    %v57 = vmul.f32 %v56, 0.00390625
    %v58 = vadd.f32 %v52, %v53
    %59 = vadd.xlane.f32.xlu0 %v58
    %v60 = vpop.xlane.xlu0 %59
    %v61 = vmul.f32 %v60, 0.00390625
    %v62 = vmax.f32 %v50, %v51
    %63 = vmax.xlane.f32.xlu0 %v62
    %v64 = vpop.xlane.xlu0 %63
    %v65 = vmax.f32 %v52, %v53
    %66 = vmax.xlane.f32.xlu0 %v65
    %v67 = vpop.xlane.xlu0 %66
    %v70 = vunpack.c.l.s4 839922192
    %v71 = vunpack.c.0.s8 %v70
    %v72 = vlaneseq
    %v73 = vshrl.u32 %v72, 7
    %v74 = vsub.s32 %v71, %v73
    %v75 = vrot.slane %v57, %v74
    %v77 = vunpack.c.l.s4 1985246804
    %v78 = vunpack.c.0.s8 %v77
    %v79 = vlaneseq
    %v80 = vshrl.u32 %v79, 7
    %v81 = vsub.s32 %v78, %v80
    %v82 = vrot.slane %v57, %v81
    %v85 = vld [vmem:[%s3] sm:$0xf]
    %v87 = vlaneseq
    %v88 = vshrl.u32 %v87, 7
    %v89 = vsub.s32 0, %v88
    %v90 = vrot.slane %v85, %v89
    %92 = vbcast.lane.b32.xlu0 %v90, 256
    %v93 = vpop.permute.xlu0 %92
    %v94 = vlaneseq
    %v95 = vshrl.u32 %v94, 7
    %v96 = vsub.s32 1, %v95
    %v97 = vrot.slane %v85, %v96
    %99 = vbcast.lane.b32.xlu0 %v97, 256
    %v100 = vpop.permute.xlu0 %99
    %v101 = vlaneseq
    %v102 = vshrl.u32 %v101, 7
    %v103 = vsub.s32 2, %v102
    %v104 = vrot.slane %v85, %v103
    %106 = vbcast.lane.b32.xlu0 %v104, 256
    %v107 = vpop.permute.xlu0 %106
    %v108 = vlaneseq
    %v109 = vshrl.u32 %v108, 7
    %v110 = vsub.s32 3, %v109
    %v111 = vrot.slane %v85, %v110
    %113 = vbcast.lane.b32.xlu0 %v111, 256
    %v114 = vpop.permute.xlu0 %113
    %v119 = vmul.f32 %v75, %v93
    %v120 = vmul.f32 %v75, %v100
    %v121 = vmul.f32 %v75, %v107
    %v122 = vmul.f32 %v75, %v114
    %v123 = vmul.f32 %v82, %v93
    %v124 = vmul.f32 %v82, %v100
    %v125 = vmul.f32 %v82, %v107
    %v126 = vmul.f32 %v82, %v114
    %135 = vset.pattern.permute.xlu0 0
    %136 = vperm.xlu0 %135, %v119
    %v137 = vpop.permute.xlu0 %136
    %138 = vset.pattern.permute.xlu0 0
    %139 = vperm.xlu0 %138, %v120
    %v140 = vpop.permute.xlu0 %139
    %141 = vset.pattern.permute.xlu0 0
    %142 = vperm.xlu0 %141, %v121
    %v143 = vpop.permute.xlu0 %142
    %144 = vset.pattern.permute.xlu0 0
    %145 = vperm.xlu0 %144, %v122
    %v146 = vpop.permute.xlu0 %145
    %147 = vset.pattern.permute.xlu0 0
    %148 = vperm.xlu0 %147, %v123
    %v149 = vpop.permute.xlu0 %148
    %150 = vset.pattern.permute.xlu0 0
    %151 = vperm.xlu0 %150, %v124
    %v152 = vpop.permute.xlu0 %151
    %153 = vset.pattern.permute.xlu0 0
    %154 = vperm.xlu0 %153, %v125
    %v155 = vpop.permute.xlu0 %154
    %156 = vset.pattern.permute.xlu0 0
    %157 = vperm.xlu0 %156, %v126
    %v158 = vpop.permute.xlu0 %157
    %v159 = vlaneseq
    %v160 = vand.u32 %v159, 127
    %v161 = vlaneseq
    %v162 = vshrl.u32 %v161, 7
    %v163 = vsub.s32 %v160, %v162
    %v164 = vrot.slane %v137, %v163
    %v165 = vlaneseq
    %v166 = vshrl.u32 %v165, 7
    %v167 = vsub.s32 %v160, %v166
    %v168 = vrot.slane %v140, %v167
    %v169 = vlaneseq
    %v170 = vshrl.u32 %v169, 7
    %v171 = vsub.s32 %v160, %v170
    %v172 = vrot.slane %v143, %v171
    %v173 = vlaneseq
    %v174 = vshrl.u32 %v173, 7
    %v175 = vsub.s32 %v160, %v174
    %v176 = vrot.slane %v146, %v175
    %v177 = vlaneseq
    %v178 = vshrl.u32 %v177, 7
    %v179 = vsub.s32 %v160, %v178
    %v180 = vrot.slane %v149, %v179
    %v181 = vlaneseq
    %v182 = vshrl.u32 %v181, 7
    %v183 = vsub.s32 %v160, %v182
    %v184 = vrot.slane %v152, %v183
    %v185 = vlaneseq
    %v186 = vshrl.u32 %v185, 7
    %v187 = vsub.s32 %v160, %v186
    %v188 = vrot.slane %v155, %v187
    %v189 = vlaneseq
    %v190 = vshrl.u32 %v189, 7
    %v191 = vsub.s32 %v160, %v190
    %v192 = vrot.slane %v158, %v191
    %vm193 = vcmask 1041409
    %v194 = vsel %vm193, %v168, %v164
    %vm195 = vcmask 1042434
    %v196 = vsel %vm195, %v172, %v194
    %vm197 = vcmask 1043459
    %v198 = vsel %vm197, %v176, %v196
    %v199 = vsel %vm193, %v184, %v180
    %v200 = vsel %vm195, %v188, %v199
    %v201 = vsel %vm197, %v192, %v200
    %vm204 = vcmask 27648
    %v205 = vsel %vm204, %v198, 0.0
    %206 = vadd.xlane.f32.xlu0 %v205
    %v207 = vpop.xlane.xlu0 %206
    %v208 = vsel %vm204, %v201, 0.0
    %209 = vadd.xlane.f32.xlu0 %v208
    %v210 = vpop.xlane.xlu0 %209
    %s211 = sld [smem:[#allocation2]]
    %v212 = vstv %s211
    %v213 = vadd.f32 %v207, %v212
    %v214 = vadd.f32 %v210, %v212
    %v217 = vunpack.c.l.s4 839922192
    %v218 = vunpack.c.0.s8 %v217
    %v219 = vlaneseq
    %v220 = vshrl.u32 %v219, 7
    %v221 = vsub.s32 %v218, %v220
    %v222 = vrot.slane %v61, %v221
    %v224 = vunpack.c.l.s4 1985246804
    %v225 = vunpack.c.0.s8 %v224
    %v226 = vlaneseq
    %v227 = vshrl.u32 %v226, 7
    %v228 = vsub.s32 %v225, %v227
    %v229 = vrot.slane %v61, %v228
    %v232 = vld [vmem:[%s4] sm:$0xf]
    %v234 = vlaneseq
    %v235 = vshrl.u32 %v234, 7
    %v236 = vsub.s32 0, %v235
    %v237 = vrot.slane %v232, %v236
    %239 = vbcast.lane.b32.xlu0 %v237, 256
    %v240 = vpop.permute.xlu0 %239
    %v241 = vlaneseq
    %v242 = vshrl.u32 %v241, 7
    %v243 = vsub.s32 1, %v242
    %v244 = vrot.slane %v232, %v243
    %246 = vbcast.lane.b32.xlu0 %v244, 256
    %v247 = vpop.permute.xlu0 %246
    %v248 = vlaneseq
    %v249 = vshrl.u32 %v248, 7
    %v250 = vsub.s32 2, %v249
    %v251 = vrot.slane %v232, %v250
    %253 = vbcast.lane.b32.xlu0 %v251, 256
    %v254 = vpop.permute.xlu0 %253
    %v255 = vlaneseq
    %v256 = vshrl.u32 %v255, 7
    %v257 = vsub.s32 3, %v256
    %v258 = vrot.slane %v232, %v257
    %260 = vbcast.lane.b32.xlu0 %v258, 256
    %v261 = vpop.permute.xlu0 %260
    %v266 = vmul.f32 %v222, %v240
    %v267 = vmul.f32 %v222, %v247
    %v268 = vmul.f32 %v222, %v254
    %v269 = vmul.f32 %v222, %v261
    %v270 = vmul.f32 %v229, %v240
    %v271 = vmul.f32 %v229, %v247
    %v272 = vmul.f32 %v229, %v254
    %v273 = vmul.f32 %v229, %v261
    %282 = vset.pattern.permute.xlu0 0
    %283 = vperm.xlu0 %282, %v266
    %v284 = vpop.permute.xlu0 %283
    %285 = vset.pattern.permute.xlu0 0
    %286 = vperm.xlu0 %285, %v267
    %v287 = vpop.permute.xlu0 %286
    %288 = vset.pattern.permute.xlu0 0
    %289 = vperm.xlu0 %288, %v268
    %v290 = vpop.permute.xlu0 %289
    %291 = vset.pattern.permute.xlu0 0
    %292 = vperm.xlu0 %291, %v269
    %v293 = vpop.permute.xlu0 %292
    %294 = vset.pattern.permute.xlu0 0
    %295 = vperm.xlu0 %294, %v270
    %v296 = vpop.permute.xlu0 %295
    %297 = vset.pattern.permute.xlu0 0
    %298 = vperm.xlu0 %297, %v271
    %v299 = vpop.permute.xlu0 %298
    %300 = vset.pattern.permute.xlu0 0
    %301 = vperm.xlu0 %300, %v272
    %v302 = vpop.permute.xlu0 %301
    %303 = vset.pattern.permute.xlu0 0
    %304 = vperm.xlu0 %303, %v273
    %v305 = vpop.permute.xlu0 %304
    %v306 = vlaneseq
    %v307 = vshrl.u32 %v306, 7
    %v308 = vsub.s32 %v160, %v307
    %v309 = vrot.slane %v284, %v308
    %v310 = vlaneseq
    %v311 = vshrl.u32 %v310, 7
    %v312 = vsub.s32 %v160, %v311
    %v313 = vrot.slane %v287, %v312
    %v314 = vlaneseq
    %v315 = vshrl.u32 %v314, 7
    %v316 = vsub.s32 %v160, %v315
    %v317 = vrot.slane %v290, %v316
    %v318 = vlaneseq
    %v319 = vshrl.u32 %v318, 7
    %v320 = vsub.s32 %v160, %v319
    %v321 = vrot.slane %v293, %v320
    %v322 = vlaneseq
    %v323 = vshrl.u32 %v322, 7
    %v324 = vsub.s32 %v160, %v323
    %v325 = vrot.slane %v296, %v324
    %v326 = vlaneseq
    %v327 = vshrl.u32 %v326, 7
    %v328 = vsub.s32 %v160, %v327
    %v329 = vrot.slane %v299, %v328
    %v330 = vlaneseq
    %v331 = vshrl.u32 %v330, 7
    %v332 = vsub.s32 %v160, %v331
    %v333 = vrot.slane %v302, %v332
    %v334 = vlaneseq
    %v335 = vshrl.u32 %v334, 7
    %v336 = vsub.s32 %v160, %v335
    %v337 = vrot.slane %v305, %v336
    %v338 = vsel %vm193, %v313, %v309
    %v339 = vsel %vm195, %v317, %v338
    %v340 = vsel %vm197, %v321, %v339
    %v341 = vsel %vm193, %v329, %v325
    %v342 = vsel %vm195, %v333, %v341
    %v343 = vsel %vm197, %v337, %v342
    %v346 = vsel %vm204, %v340, 0.0
    %347 = vadd.xlane.f32.xlu0 %v346
    %v348 = vpop.xlane.xlu0 %347
    %v349 = vsel %vm204, %v343, 0.0
    %350 = vadd.xlane.f32.xlu0 %v349
    %v351 = vpop.xlane.xlu0 %350
    %s352 = sld [smem:[#allocation2 + $0x1]]
    %v353 = vstv %s352
    %v354 = vadd.f32 %v348, %v353
    %v355 = vadd.f32 %v351, %v353
    %v356 = vxor.u32 %v213, 2147483648
    %v357 = vxor.u32 %v214, 2147483648
    %v358 = vmul.f32 %v356, 1.442695
    %v359 = vpow.pop %v358
    %v360 = vmul.f32 %v357, 1.442695
    %v361 = vpow.pop %v360
    %v362 = vadd.f32 %v359, 1.0
    %v363 = vadd.f32 %v361, 1.0
    %v364 = vrcp.pop %v362
    %v365 = vmul.f32 1.0, %v364
    %v366 = vrcp.pop %v363
    %v367 = vmul.f32 1.0, %v366
    %v368 = vxor.u32 %v354, 2147483648
    %v369 = vxor.u32 %v355, 2147483648
    %v370 = vmul.f32 %v368, 1.442695
    %v371 = vpow.pop %v370
    %v372 = vmul.f32 %v369, 1.442695
    %v373 = vpow.pop %v372
    %v374 = vadd.f32 %v371, 1.0
    %v375 = vadd.f32 %v373, 1.0
    %v376 = vrcp.pop %v374
    %v377 = vmul.f32 1.0, %v376
    %v378 = vrcp.pop %v375
    %v379 = vmul.f32 1.0, %v378
    %v382 = vcombine.low %v365, %v367
    %v383 = vcombine.high %v365, %v367
    %v386 = vmul.f32 %v50, %v382
    %v387 = vmul.f32 %v51, %v383
    %388 = vst [vmem:[#allocation5] sm:$0xff] %v386
    %389 = vst [vmem:[#allocation5 + $0x8] sm:$0xff] %v387
    %v392 = vcombine.low %v377, %v379
    %v393 = vcombine.high %v377, %v379
    %v396 = vmul.f32 %v52, %v392
    %v397 = vmul.f32 %v53, %v393
    %398 = vst [vmem:[#allocation6] sm:$0xff] %v396
    %399 = vst [vmem:[#allocation6 + $0x8] sm:$0xff] %v397
    %v402 = vunpack.c.l.s4 839922192
    %v403 = vunpack.c.0.s8 %v402
    %v404 = vlaneseq
    %v405 = vshrl.u32 %v404, 7
    %v406 = vsub.s32 %v403, %v405
    %v407 = vrot.slane %v64, %v406
    %v409 = vunpack.c.l.s4 1985246804
    %v410 = vunpack.c.0.s8 %v409
    %v411 = vlaneseq
    %v412 = vshrl.u32 %v411, 7
    %v413 = vsub.s32 %v410, %v412
    %v414 = vrot.slane %v64, %v413
    %v417 = vld [vmem:[%s5] sm:$0xff]
    %v419 = vcombine.high %v417, %v417
    %v420 = vcombine.low %v417, %v419
    %v421 = vlaneseq
    %v422 = vshrl.u32 %v421, 7
    %v423 = vsub.s32 0, %v422
    %v424 = vrot.slane %v420, %v423
    %426 = vbcast.lane.b32.xlu0 %v424, 256
    %v427 = vpop.permute.xlu0 %426
    %v428 = vlaneseq
    %v429 = vshrl.u32 %v428, 7
    %v430 = vsub.s32 1, %v429
    %v431 = vrot.slane %v420, %v430
    %433 = vbcast.lane.b32.xlu0 %v431, 256
    %v434 = vpop.permute.xlu0 %433
    %v435 = vlaneseq
    %v436 = vshrl.u32 %v435, 7
    %v437 = vsub.s32 2, %v436
    %v438 = vrot.slane %v420, %v437
    %440 = vbcast.lane.b32.xlu0 %v438, 256
    %v441 = vpop.permute.xlu0 %440
    %v442 = vlaneseq
    %v443 = vshrl.u32 %v442, 7
    %v444 = vsub.s32 3, %v443
    %v445 = vrot.slane %v420, %v444
    %447 = vbcast.lane.b32.xlu0 %v445, 256
    %v448 = vpop.permute.xlu0 %447
    %v449 = vlaneseq
    %v450 = vshrl.u32 %v449, 7
    %v451 = vsub.s32 4, %v450
    %v452 = vrot.slane %v420, %v451
    %454 = vbcast.lane.b32.xlu0 %v452, 256
    %v455 = vpop.permute.xlu0 %454
    %v456 = vlaneseq
    %v457 = vshrl.u32 %v456, 7
    %v458 = vsub.s32 5, %v457
    %v459 = vrot.slane %v420, %v458
    %461 = vbcast.lane.b32.xlu0 %v459, 256
    %v462 = vpop.permute.xlu0 %461
    %v463 = vlaneseq
    %v464 = vshrl.u32 %v463, 7
    %v465 = vsub.s32 6, %v464
    %v466 = vrot.slane %v420, %v465
    %468 = vbcast.lane.b32.xlu0 %v466, 256
    %v469 = vpop.permute.xlu0 %468
    %v470 = vlaneseq
    %v471 = vshrl.u32 %v470, 7
    %v472 = vsub.s32 7, %v471
    %v473 = vrot.slane %v420, %v472
    %475 = vbcast.lane.b32.xlu0 %v473, 256
    %v476 = vpop.permute.xlu0 %475
    %478 = vbcast.lane.b32.xlu0 %v424, 256
    %v479 = vpop.permute.xlu0 %478
    %481 = vbcast.lane.b32.xlu0 %v431, 256
    %v482 = vpop.permute.xlu0 %481
    %484 = vbcast.lane.b32.xlu0 %v438, 256
    %v485 = vpop.permute.xlu0 %484
    %487 = vbcast.lane.b32.xlu0 %v445, 256
    %v488 = vpop.permute.xlu0 %487
    %490 = vbcast.lane.b32.xlu0 %v452, 256
    %v491 = vpop.permute.xlu0 %490
    %493 = vbcast.lane.b32.xlu0 %v459, 256
    %v494 = vpop.permute.xlu0 %493
    %496 = vbcast.lane.b32.xlu0 %v466, 256
    %v497 = vpop.permute.xlu0 %496
    %499 = vbcast.lane.b32.xlu0 %v473, 256
    %v500 = vpop.permute.xlu0 %499
    %v517 = vmul.f32 %v407, %v427
    %v518 = vmul.f32 %v407, %v434
    %v519 = vmul.f32 %v407, %v441
    %v520 = vmul.f32 %v407, %v448
    %v521 = vmul.f32 %v407, %v455
    %v522 = vmul.f32 %v407, %v462
    %v523 = vmul.f32 %v407, %v469
    %v524 = vmul.f32 %v407, %v476
    %v525 = vmul.f32 %v414, %v479
    %v526 = vmul.f32 %v414, %v482
    %v527 = vmul.f32 %v414, %v485
    %v528 = vmul.f32 %v414, %v488
    %v529 = vmul.f32 %v414, %v491
    %v530 = vmul.f32 %v414, %v494
    %v531 = vmul.f32 %v414, %v497
    %v532 = vmul.f32 %v414, %v500
    %549 = vset.pattern.permute.xlu0 0
    %550 = vperm.xlu0 %549, %v517
    %v551 = vpop.permute.xlu0 %550
    %552 = vset.pattern.permute.xlu0 0
    %553 = vperm.xlu0 %552, %v518
    %v554 = vpop.permute.xlu0 %553
    %555 = vset.pattern.permute.xlu0 0
    %556 = vperm.xlu0 %555, %v519
    %v557 = vpop.permute.xlu0 %556
    %558 = vset.pattern.permute.xlu0 0
    %559 = vperm.xlu0 %558, %v520
    %v560 = vpop.permute.xlu0 %559
    %561 = vset.pattern.permute.xlu0 0
    %562 = vperm.xlu0 %561, %v521
    %v563 = vpop.permute.xlu0 %562
    %564 = vset.pattern.permute.xlu0 0
    %565 = vperm.xlu0 %564, %v522
    %v566 = vpop.permute.xlu0 %565
    %567 = vset.pattern.permute.xlu0 0
    %568 = vperm.xlu0 %567, %v523
    %v569 = vpop.permute.xlu0 %568
    %570 = vset.pattern.permute.xlu0 0
    %571 = vperm.xlu0 %570, %v524
    %v572 = vpop.permute.xlu0 %571
    %573 = vset.pattern.permute.xlu0 0
    %574 = vperm.xlu0 %573, %v525
    %v575 = vpop.permute.xlu0 %574
    %576 = vset.pattern.permute.xlu0 0
    %577 = vperm.xlu0 %576, %v526
    %v578 = vpop.permute.xlu0 %577
    %579 = vset.pattern.permute.xlu0 0
    %580 = vperm.xlu0 %579, %v527
    %v581 = vpop.permute.xlu0 %580
    %582 = vset.pattern.permute.xlu0 0
    %583 = vperm.xlu0 %582, %v528
    %v584 = vpop.permute.xlu0 %583
    %585 = vset.pattern.permute.xlu0 0
    %586 = vperm.xlu0 %585, %v529
    %v587 = vpop.permute.xlu0 %586
    %588 = vset.pattern.permute.xlu0 0
    %589 = vperm.xlu0 %588, %v530
    %v590 = vpop.permute.xlu0 %589
    %591 = vset.pattern.permute.xlu0 0
    %592 = vperm.xlu0 %591, %v531
    %v593 = vpop.permute.xlu0 %592
    %594 = vset.pattern.permute.xlu0 0
    %595 = vperm.xlu0 %594, %v532
    %v596 = vpop.permute.xlu0 %595
    %v597 = vlaneseq
    %v598 = vshrl.u32 %v597, 7
    %v599 = vsub.s32 %v160, %v598
    %v600 = vrot.slane %v551, %v599
    %v601 = vlaneseq
    %v602 = vshrl.u32 %v601, 7
    %v603 = vsub.s32 %v160, %v602
    %v604 = vrot.slane %v554, %v603
    %v605 = vlaneseq
    %v606 = vshrl.u32 %v605, 7
    %v607 = vsub.s32 %v160, %v606
    %v608 = vrot.slane %v557, %v607
    %v609 = vlaneseq
    %v610 = vshrl.u32 %v609, 7
    %v611 = vsub.s32 %v160, %v610
    %v612 = vrot.slane %v560, %v611
    %v613 = vlaneseq
    %v614 = vshrl.u32 %v613, 7
    %v615 = vsub.s32 %v160, %v614
    %v616 = vrot.slane %v563, %v615
    %v617 = vlaneseq
    %v618 = vshrl.u32 %v617, 7
    %v619 = vsub.s32 %v160, %v618
    %v620 = vrot.slane %v566, %v619
    %v621 = vlaneseq
    %v622 = vshrl.u32 %v621, 7
    %v623 = vsub.s32 %v160, %v622
    %v624 = vrot.slane %v569, %v623
    %v625 = vlaneseq
    %v626 = vshrl.u32 %v625, 7
    %v627 = vsub.s32 %v160, %v626
    %v628 = vrot.slane %v572, %v627
    %v629 = vlaneseq
    %v630 = vshrl.u32 %v629, 7
    %v631 = vsub.s32 %v160, %v630
    %v632 = vrot.slane %v575, %v631
    %v633 = vlaneseq
    %v634 = vshrl.u32 %v633, 7
    %v635 = vsub.s32 %v160, %v634
    %v636 = vrot.slane %v578, %v635
    %v637 = vlaneseq
    %v638 = vshrl.u32 %v637, 7
    %v639 = vsub.s32 %v160, %v638
    %v640 = vrot.slane %v581, %v639
    %v641 = vlaneseq
    %v642 = vshrl.u32 %v641, 7
    %v643 = vsub.s32 %v160, %v642
    %v644 = vrot.slane %v584, %v643
    %v645 = vlaneseq
    %v646 = vshrl.u32 %v645, 7
    %v647 = vsub.s32 %v160, %v646
    %v648 = vrot.slane %v587, %v647
    %v649 = vlaneseq
    %v650 = vshrl.u32 %v649, 7
    %v651 = vsub.s32 %v160, %v650
    %v652 = vrot.slane %v590, %v651
    %v653 = vlaneseq
    %v654 = vshrl.u32 %v653, 7
    %v655 = vsub.s32 %v160, %v654
    %v656 = vrot.slane %v593, %v655
    %v657 = vlaneseq
    %v658 = vshrl.u32 %v657, 7
    %v659 = vsub.s32 %v160, %v658
    %v660 = vrot.slane %v596, %v659
    %v661 = vsel %vm193, %v604, %v600
    %v662 = vsel %vm195, %v608, %v661
    %v663 = vsel %vm197, %v612, %v662
    %vm664 = vcmask 1044484
    %v665 = vsel %vm664, %v616, %v663
    %vm666 = vcmask 1045509
    %v667 = vsel %vm666, %v620, %v665
    %vm668 = vcmask 1046534
    %v669 = vsel %vm668, %v624, %v667
    %vm670 = vcmask 1047559
    %v671 = vsel %vm670, %v628, %v669
    %v672 = vsel %vm193, %v636, %v632
    %v673 = vsel %vm195, %v640, %v672
    %v674 = vsel %vm197, %v644, %v673
    %v675 = vsel %vm664, %v648, %v674
    %v676 = vsel %vm666, %v652, %v675
    %v677 = vsel %vm668, %v656, %v676
    %v678 = vsel %vm670, %v660, %v677
    %vm681 = vcmask 31744
    %v682 = vsel %vm681, %v671, 0.0
    %683 = vadd.xlane.f32.xlu0 %v682
    %v684 = vpop.xlane.xlu0 %683
    %v685 = vsel %vm681, %v678, 0.0
    %686 = vadd.xlane.f32.xlu0 %v685
    %v687 = vpop.xlane.xlu0 %686
    %v690 = vunpack.c.l.s4 839922192
    %v691 = vunpack.c.0.s8 %v690
    %v692 = vlaneseq
    %v693 = vshrl.u32 %v692, 7
    %v694 = vsub.s32 %v691, %v693
    %v695 = vrot.slane %v67, %v694
    %v697 = vunpack.c.l.s4 1985246804
    %v698 = vunpack.c.0.s8 %v697
    %v699 = vlaneseq
    %v700 = vshrl.u32 %v699, 7
    %v701 = vsub.s32 %v698, %v700
    %v702 = vrot.slane %v67, %v701
    %s705 = scalar_lea.vmem %s5, 8
    %v706 = vld [vmem:[%s705] sm:$0xff]
    %v708 = vcombine.high %v706, %v706
    %v709 = vcombine.low %v706, %v708
    %v710 = vlaneseq
    %v711 = vshrl.u32 %v710, 7
    %v712 = vsub.s32 0, %v711
    %v713 = vrot.slane %v709, %v712
    %715 = vbcast.lane.b32.xlu0 %v713, 256
    %v716 = vpop.permute.xlu0 %715
    %v717 = vlaneseq
    %v718 = vshrl.u32 %v717, 7
    %v719 = vsub.s32 1, %v718
    %v720 = vrot.slane %v709, %v719
    %722 = vbcast.lane.b32.xlu0 %v720, 256
    %v723 = vpop.permute.xlu0 %722
    %v724 = vlaneseq
    %v725 = vshrl.u32 %v724, 7
    %v726 = vsub.s32 2, %v725
    %v727 = vrot.slane %v709, %v726
    %729 = vbcast.lane.b32.xlu0 %v727, 256
    %v730 = vpop.permute.xlu0 %729
    %v731 = vlaneseq
    %v732 = vshrl.u32 %v731, 7
    %v733 = vsub.s32 3, %v732
    %v734 = vrot.slane %v709, %v733
    %736 = vbcast.lane.b32.xlu0 %v734, 256
    %v737 = vpop.permute.xlu0 %736
    %v738 = vlaneseq
    %v739 = vshrl.u32 %v738, 7
    %v740 = vsub.s32 4, %v739
    %v741 = vrot.slane %v709, %v740
    %743 = vbcast.lane.b32.xlu0 %v741, 256
    %v744 = vpop.permute.xlu0 %743
    %v745 = vlaneseq
    %v746 = vshrl.u32 %v745, 7
    %v747 = vsub.s32 5, %v746
    %v748 = vrot.slane %v709, %v747
    %750 = vbcast.lane.b32.xlu0 %v748, 256
    %v751 = vpop.permute.xlu0 %750
    %v752 = vlaneseq
    %v753 = vshrl.u32 %v752, 7
    %v754 = vsub.s32 6, %v753
    %v755 = vrot.slane %v709, %v754
    %757 = vbcast.lane.b32.xlu0 %v755, 256
    %v758 = vpop.permute.xlu0 %757
    %v759 = vlaneseq
    %v760 = vshrl.u32 %v759, 7
    %v761 = vsub.s32 7, %v760
    %v762 = vrot.slane %v709, %v761
    %764 = vbcast.lane.b32.xlu0 %v762, 256
    %v765 = vpop.permute.xlu0 %764
    %767 = vbcast.lane.b32.xlu0 %v713, 256
    %v768 = vpop.permute.xlu0 %767
    %770 = vbcast.lane.b32.xlu0 %v720, 256
    %v771 = vpop.permute.xlu0 %770
    %773 = vbcast.lane.b32.xlu0 %v727, 256
    %v774 = vpop.permute.xlu0 %773
    %776 = vbcast.lane.b32.xlu0 %v734, 256
    %v777 = vpop.permute.xlu0 %776
    %779 = vbcast.lane.b32.xlu0 %v741, 256
    %v780 = vpop.permute.xlu0 %779
    %782 = vbcast.lane.b32.xlu0 %v748, 256
    %v783 = vpop.permute.xlu0 %782
    %785 = vbcast.lane.b32.xlu0 %v755, 256
    %v786 = vpop.permute.xlu0 %785
    %788 = vbcast.lane.b32.xlu0 %v762, 256
    %v789 = vpop.permute.xlu0 %788
    %v806 = vmul.f32 %v695, %v716
    %v807 = vmul.f32 %v695, %v723
    %v808 = vmul.f32 %v695, %v730
    %v809 = vmul.f32 %v695, %v737
    %v810 = vmul.f32 %v695, %v744
    %v811 = vmul.f32 %v695, %v751
    %v812 = vmul.f32 %v695, %v758
    %v813 = vmul.f32 %v695, %v765
    %v814 = vmul.f32 %v702, %v768
    %v815 = vmul.f32 %v702, %v771
    %v816 = vmul.f32 %v702, %v774
    %v817 = vmul.f32 %v702, %v777
    %v818 = vmul.f32 %v702, %v780
    %v819 = vmul.f32 %v702, %v783
    %v820 = vmul.f32 %v702, %v786
    %v821 = vmul.f32 %v702, %v789
    %838 = vset.pattern.permute.xlu0 0
    %839 = vperm.xlu0 %838, %v806
    %v840 = vpop.permute.xlu0 %839
    %841 = vset.pattern.permute.xlu0 0
    %842 = vperm.xlu0 %841, %v807
    %v843 = vpop.permute.xlu0 %842
    %844 = vset.pattern.permute.xlu0 0
    %845 = vperm.xlu0 %844, %v808
    %v846 = vpop.permute.xlu0 %845
    %847 = vset.pattern.permute.xlu0 0
    %848 = vperm.xlu0 %847, %v809
    %v849 = vpop.permute.xlu0 %848
    %850 = vset.pattern.permute.xlu0 0
    %851 = vperm.xlu0 %850, %v810
    %v852 = vpop.permute.xlu0 %851
    %853 = vset.pattern.permute.xlu0 0
    %854 = vperm.xlu0 %853, %v811
    %v855 = vpop.permute.xlu0 %854
    %856 = vset.pattern.permute.xlu0 0
    %857 = vperm.xlu0 %856, %v812
    %v858 = vpop.permute.xlu0 %857
    %859 = vset.pattern.permute.xlu0 0
    %860 = vperm.xlu0 %859, %v813
    %v861 = vpop.permute.xlu0 %860
    %862 = vset.pattern.permute.xlu0 0
    %863 = vperm.xlu0 %862, %v814
    %v864 = vpop.permute.xlu0 %863
    %865 = vset.pattern.permute.xlu0 0
    %866 = vperm.xlu0 %865, %v815
    %v867 = vpop.permute.xlu0 %866
    %868 = vset.pattern.permute.xlu0 0
    %869 = vperm.xlu0 %868, %v816
    %v870 = vpop.permute.xlu0 %869
    %871 = vset.pattern.permute.xlu0 0
    %872 = vperm.xlu0 %871, %v817
    %v873 = vpop.permute.xlu0 %872
    %874 = vset.pattern.permute.xlu0 0
    %875 = vperm.xlu0 %874, %v818
    %v876 = vpop.permute.xlu0 %875
    %877 = vset.pattern.permute.xlu0 0
    %878 = vperm.xlu0 %877, %v819
    %v879 = vpop.permute.xlu0 %878
    %880 = vset.pattern.permute.xlu0 0
    %881 = vperm.xlu0 %880, %v820
    %v882 = vpop.permute.xlu0 %881
    %883 = vset.pattern.permute.xlu0 0
    %884 = vperm.xlu0 %883, %v821
    %v885 = vpop.permute.xlu0 %884
    %v886 = vlaneseq
    %v887 = vshrl.u32 %v886, 7
    %v888 = vsub.s32 %v160, %v887
    %v889 = vrot.slane %v840, %v888
    %v890 = vlaneseq
    %v891 = vshrl.u32 %v890, 7
    %v892 = vsub.s32 %v160, %v891
    %v893 = vrot.slane %v843, %v892
    %v894 = vlaneseq
    %v895 = vshrl.u32 %v894, 7
    %v896 = vsub.s32 %v160, %v895
    %v897 = vrot.slane %v846, %v896
    %v898 = vlaneseq
    %v899 = vshrl.u32 %v898, 7
    %v900 = vsub.s32 %v160, %v899
    %v901 = vrot.slane %v849, %v900
    %v902 = vlaneseq
    %v903 = vshrl.u32 %v902, 7
    %v904 = vsub.s32 %v160, %v903
    %v905 = vrot.slane %v852, %v904
    %v906 = vlaneseq
    %v907 = vshrl.u32 %v906, 7
    %v908 = vsub.s32 %v160, %v907
    %v909 = vrot.slane %v855, %v908
    %v910 = vlaneseq
    %v911 = vshrl.u32 %v910, 7
    %v912 = vsub.s32 %v160, %v911
    %v913 = vrot.slane %v858, %v912
    %v914 = vlaneseq
    %v915 = vshrl.u32 %v914, 7
    %v916 = vsub.s32 %v160, %v915
    %v917 = vrot.slane %v861, %v916
    %v918 = vlaneseq
    %v919 = vshrl.u32 %v918, 7
    %v920 = vsub.s32 %v160, %v919
    %v921 = vrot.slane %v864, %v920
    %v922 = vlaneseq
    %v923 = vshrl.u32 %v922, 7
    %v924 = vsub.s32 %v160, %v923
    %v925 = vrot.slane %v867, %v924
    %v926 = vlaneseq
    %v927 = vshrl.u32 %v926, 7
    %v928 = vsub.s32 %v160, %v927
    %v929 = vrot.slane %v870, %v928
    %v930 = vlaneseq
    %v931 = vshrl.u32 %v930, 7
    %v932 = vsub.s32 %v160, %v931
    %v933 = vrot.slane %v873, %v932
    %v934 = vlaneseq
    %v935 = vshrl.u32 %v934, 7
    %v936 = vsub.s32 %v160, %v935
    %v937 = vrot.slane %v876, %v936
    %v938 = vlaneseq
    %v939 = vshrl.u32 %v938, 7
    %v940 = vsub.s32 %v160, %v939
    %v941 = vrot.slane %v879, %v940
    %v942 = vlaneseq
    %v943 = vshrl.u32 %v942, 7
    %v944 = vsub.s32 %v160, %v943
    %v945 = vrot.slane %v882, %v944
    %v946 = vlaneseq
    %v947 = vshrl.u32 %v946, 7
    %v948 = vsub.s32 %v160, %v947
    %v949 = vrot.slane %v885, %v948
    %v950 = vsel %vm193, %v893, %v889
    %v951 = vsel %vm195, %v897, %v950
    %v952 = vsel %vm197, %v901, %v951
    %v953 = vsel %vm664, %v905, %v952
    %v954 = vsel %vm666, %v909, %v953
    %v955 = vsel %vm668, %v913, %v954
    %v956 = vsel %vm670, %v917, %v955
    %v957 = vsel %vm193, %v925, %v921
    %v958 = vsel %vm195, %v929, %v957
    %v959 = vsel %vm197, %v933, %v958
    %v960 = vsel %vm664, %v937, %v959
    %v961 = vsel %vm666, %v941, %v960
    %v962 = vsel %vm668, %v945, %v961
    %v963 = vsel %vm670, %v949, %v962
    %v966 = vsel %vm681, %v956, 0.0
    %967 = vadd.xlane.f32.xlu0 %v966
    %v968 = vpop.xlane.xlu0 %967
    %v969 = vsel %vm681, %v963, 0.0
    %970 = vadd.xlane.f32.xlu0 %v969
    %v971 = vpop.xlane.xlu0 %970
    %v972 = vadd.f32 %v684, %v968
    %v973 = vadd.f32 %v687, %v971
    %s974 = scalar_lea.vmem %s5, 16
    %v975 = vld [vmem:[%s974] sm:$0xff]
    %v977 = vcombine.high %v975, %v975
    %v978 = vcombine.low %v975, %v977
    %v979 = vlaneseq
    %v980 = vshrl.u32 %v979, 7
    %v981 = vsub.s32 0, %v980
    %v982 = vrot.slane %v978, %v981
    %984 = vbcast.lane.b32.xlu0 %v982, 256
    %v985 = vpop.permute.xlu0 %984
    %v986 = vlaneseq
    %v987 = vshrl.u32 %v986, 7
    %v988 = vsub.s32 1, %v987
    %v989 = vrot.slane %v978, %v988
    %991 = vbcast.lane.b32.xlu0 %v989, 256
    %v992 = vpop.permute.xlu0 %991
    %v993 = vlaneseq
    %v994 = vshrl.u32 %v993, 7
    %v995 = vsub.s32 2, %v994
    %v996 = vrot.slane %v978, %v995
    %998 = vbcast.lane.b32.xlu0 %v996, 256
    %v999 = vpop.permute.xlu0 %998
    %v1000 = vlaneseq
    %v1001 = vshrl.u32 %v1000, 7
    %v1002 = vsub.s32 3, %v1001
    %v1003 = vrot.slane %v978, %v1002
    %1005 = vbcast.lane.b32.xlu0 %v1003, 256
    %v1006 = vpop.permute.xlu0 %1005
    %v1007 = vlaneseq
    %v1008 = vshrl.u32 %v1007, 7
    %v1009 = vsub.s32 4, %v1008
    %v1010 = vrot.slane %v978, %v1009
    %1012 = vbcast.lane.b32.xlu0 %v1010, 256
    %v1013 = vpop.permute.xlu0 %1012
    %v1014 = vlaneseq
    %v1015 = vshrl.u32 %v1014, 7
    %v1016 = vsub.s32 5, %v1015
    %v1017 = vrot.slane %v978, %v1016
    %1019 = vbcast.lane.b32.xlu0 %v1017, 256
    %v1020 = vpop.permute.xlu0 %1019
    %v1021 = vlaneseq
    %v1022 = vshrl.u32 %v1021, 7
    %v1023 = vsub.s32 6, %v1022
    %v1024 = vrot.slane %v978, %v1023
    %1026 = vbcast.lane.b32.xlu0 %v1024, 256
    %v1027 = vpop.permute.xlu0 %1026
    %v1028 = vlaneseq
    %v1029 = vshrl.u32 %v1028, 7
    %v1030 = vsub.s32 7, %v1029
    %v1031 = vrot.slane %v978, %v1030
    %1033 = vbcast.lane.b32.xlu0 %v1031, 256
    %v1034 = vpop.permute.xlu0 %1033
    %1036 = vbcast.lane.b32.xlu0 %v982, 256
    %v1037 = vpop.permute.xlu0 %1036
    %1039 = vbcast.lane.b32.xlu0 %v989, 256
    %v1040 = vpop.permute.xlu0 %1039
    %1042 = vbcast.lane.b32.xlu0 %v996, 256
    %v1043 = vpop.permute.xlu0 %1042
    %1045 = vbcast.lane.b32.xlu0 %v1003, 256
    %v1046 = vpop.permute.xlu0 %1045
    %1048 = vbcast.lane.b32.xlu0 %v1010, 256
    %v1049 = vpop.permute.xlu0 %1048
    %1051 = vbcast.lane.b32.xlu0 %v1017, 256
    %v1052 = vpop.permute.xlu0 %1051
    %1054 = vbcast.lane.b32.xlu0 %v1024, 256
    %v1055 = vpop.permute.xlu0 %1054
    %1057 = vbcast.lane.b32.xlu0 %v1031, 256
    %v1058 = vpop.permute.xlu0 %1057
    %v1075 = vmul.f32 %v75, %v985
    %v1076 = vmul.f32 %v75, %v992
    %v1077 = vmul.f32 %v75, %v999
    %v1078 = vmul.f32 %v75, %v1006
    %v1079 = vmul.f32 %v75, %v1013
    %v1080 = vmul.f32 %v75, %v1020
    %v1081 = vmul.f32 %v75, %v1027
    %v1082 = vmul.f32 %v75, %v1034
    %v1083 = vmul.f32 %v82, %v1037
    %v1084 = vmul.f32 %v82, %v1040
    %v1085 = vmul.f32 %v82, %v1043
    %v1086 = vmul.f32 %v82, %v1046
    %v1087 = vmul.f32 %v82, %v1049
    %v1088 = vmul.f32 %v82, %v1052
    %v1089 = vmul.f32 %v82, %v1055
    %v1090 = vmul.f32 %v82, %v1058
    %1107 = vset.pattern.permute.xlu0 0
    %1108 = vperm.xlu0 %1107, %v1075
    %v1109 = vpop.permute.xlu0 %1108
    %1110 = vset.pattern.permute.xlu0 0
    %1111 = vperm.xlu0 %1110, %v1076
    %v1112 = vpop.permute.xlu0 %1111
    %1113 = vset.pattern.permute.xlu0 0
    %1114 = vperm.xlu0 %1113, %v1077
    %v1115 = vpop.permute.xlu0 %1114
    %1116 = vset.pattern.permute.xlu0 0
    %1117 = vperm.xlu0 %1116, %v1078
    %v1118 = vpop.permute.xlu0 %1117
    %1119 = vset.pattern.permute.xlu0 0
    %1120 = vperm.xlu0 %1119, %v1079
    %v1121 = vpop.permute.xlu0 %1120
    %1122 = vset.pattern.permute.xlu0 0
    %1123 = vperm.xlu0 %1122, %v1080
    %v1124 = vpop.permute.xlu0 %1123
    %1125 = vset.pattern.permute.xlu0 0
    %1126 = vperm.xlu0 %1125, %v1081
    %v1127 = vpop.permute.xlu0 %1126
    %1128 = vset.pattern.permute.xlu0 0
    %1129 = vperm.xlu0 %1128, %v1082
    %v1130 = vpop.permute.xlu0 %1129
    %1131 = vset.pattern.permute.xlu0 0
    %1132 = vperm.xlu0 %1131, %v1083
    %v1133 = vpop.permute.xlu0 %1132
    %1134 = vset.pattern.permute.xlu0 0
    %1135 = vperm.xlu0 %1134, %v1084
    %v1136 = vpop.permute.xlu0 %1135
    %1137 = vset.pattern.permute.xlu0 0
    %1138 = vperm.xlu0 %1137, %v1085
    %v1139 = vpop.permute.xlu0 %1138
    %1140 = vset.pattern.permute.xlu0 0
    %1141 = vperm.xlu0 %1140, %v1086
    %v1142 = vpop.permute.xlu0 %1141
    %1143 = vset.pattern.permute.xlu0 0
    %1144 = vperm.xlu0 %1143, %v1087
    %v1145 = vpop.permute.xlu0 %1144
    %1146 = vset.pattern.permute.xlu0 0
    %1147 = vperm.xlu0 %1146, %v1088
    %v1148 = vpop.permute.xlu0 %1147
    %1149 = vset.pattern.permute.xlu0 0
    %1150 = vperm.xlu0 %1149, %v1089
    %v1151 = vpop.permute.xlu0 %1150
    %1152 = vset.pattern.permute.xlu0 0
    %1153 = vperm.xlu0 %1152, %v1090
    %v1154 = vpop.permute.xlu0 %1153
    %v1155 = vlaneseq
    %v1156 = vshrl.u32 %v1155, 7
    %v1157 = vsub.s32 %v160, %v1156
    %v1158 = vrot.slane %v1109, %v1157
    %v1159 = vlaneseq
    %v1160 = vshrl.u32 %v1159, 7
    %v1161 = vsub.s32 %v160, %v1160
    %v1162 = vrot.slane %v1112, %v1161
    %v1163 = vlaneseq
    %v1164 = vshrl.u32 %v1163, 7
    %v1165 = vsub.s32 %v160, %v1164
    %v1166 = vrot.slane %v1115, %v1165
    %v1167 = vlaneseq
    %v1168 = vshrl.u32 %v1167, 7
    %v1169 = vsub.s32 %v160, %v1168
    %v1170 = vrot.slane %v1118, %v1169
    %v1171 = vlaneseq
    %v1172 = vshrl.u32 %v1171, 7
    %v1173 = vsub.s32 %v160, %v1172
    %v1174 = vrot.slane %v1121, %v1173
    %v1175 = vlaneseq
    %v1176 = vshrl.u32 %v1175, 7
    %v1177 = vsub.s32 %v160, %v1176
    %v1178 = vrot.slane %v1124, %v1177
    %v1179 = vlaneseq
    %v1180 = vshrl.u32 %v1179, 7
    %v1181 = vsub.s32 %v160, %v1180
    %v1182 = vrot.slane %v1127, %v1181
    %v1183 = vlaneseq
    %v1184 = vshrl.u32 %v1183, 7
    %v1185 = vsub.s32 %v160, %v1184
    %v1186 = vrot.slane %v1130, %v1185
    %v1187 = vlaneseq
    %v1188 = vshrl.u32 %v1187, 7
    %v1189 = vsub.s32 %v160, %v1188
    %v1190 = vrot.slane %v1133, %v1189
    %v1191 = vlaneseq
    %v1192 = vshrl.u32 %v1191, 7
    %v1193 = vsub.s32 %v160, %v1192
    %v1194 = vrot.slane %v1136, %v1193
    %v1195 = vlaneseq
    %v1196 = vshrl.u32 %v1195, 7
    %v1197 = vsub.s32 %v160, %v1196
    %v1198 = vrot.slane %v1139, %v1197
    %v1199 = vlaneseq
    %v1200 = vshrl.u32 %v1199, 7
    %v1201 = vsub.s32 %v160, %v1200
    %v1202 = vrot.slane %v1142, %v1201
    %v1203 = vlaneseq
    %v1204 = vshrl.u32 %v1203, 7
    %v1205 = vsub.s32 %v160, %v1204
    %v1206 = vrot.slane %v1145, %v1205
    %v1207 = vlaneseq
    %v1208 = vshrl.u32 %v1207, 7
    %v1209 = vsub.s32 %v160, %v1208
    %v1210 = vrot.slane %v1148, %v1209
    %v1211 = vlaneseq
    %v1212 = vshrl.u32 %v1211, 7
    %v1213 = vsub.s32 %v160, %v1212
    %v1214 = vrot.slane %v1151, %v1213
    %v1215 = vlaneseq
    %v1216 = vshrl.u32 %v1215, 7
    %v1217 = vsub.s32 %v160, %v1216
    %v1218 = vrot.slane %v1154, %v1217
    %v1219 = vsel %vm193, %v1162, %v1158
    %v1220 = vsel %vm195, %v1166, %v1219
    %v1221 = vsel %vm197, %v1170, %v1220
    %v1222 = vsel %vm664, %v1174, %v1221
    %v1223 = vsel %vm666, %v1178, %v1222
    %v1224 = vsel %vm668, %v1182, %v1223
    %v1225 = vsel %vm670, %v1186, %v1224
    %v1226 = vsel %vm193, %v1194, %v1190
    %v1227 = vsel %vm195, %v1198, %v1226
    %v1228 = vsel %vm197, %v1202, %v1227
    %v1229 = vsel %vm664, %v1206, %v1228
    %v1230 = vsel %vm666, %v1210, %v1229
    %v1231 = vsel %vm668, %v1214, %v1230
    %v1232 = vsel %vm670, %v1218, %v1231
    %v1235 = vsel %vm681, %v1225, 0.0
    %1236 = vadd.xlane.f32.xlu0 %v1235
    %v1237 = vpop.xlane.xlu0 %1236
    %v1238 = vsel %vm681, %v1232, 0.0
    %1239 = vadd.xlane.f32.xlu0 %v1238
    %v1240 = vpop.xlane.xlu0 %1239
    %v1241 = vadd.f32 %v972, %v1237
    %v1242 = vadd.f32 %v973, %v1240
    %s1243 = scalar_lea.vmem %s5, 24
    %v1244 = vld [vmem:[%s1243] sm:$0xff]
    %v1246 = vcombine.high %v1244, %v1244
    %v1247 = vcombine.low %v1244, %v1246
    %v1248 = vlaneseq
    %v1249 = vshrl.u32 %v1248, 7
    %v1250 = vsub.s32 0, %v1249
    %v1251 = vrot.slane %v1247, %v1250
    %1253 = vbcast.lane.b32.xlu0 %v1251, 256
    %v1254 = vpop.permute.xlu0 %1253
    %v1255 = vlaneseq
    %v1256 = vshrl.u32 %v1255, 7
    %v1257 = vsub.s32 1, %v1256
    %v1258 = vrot.slane %v1247, %v1257
    %1260 = vbcast.lane.b32.xlu0 %v1258, 256
    %v1261 = vpop.permute.xlu0 %1260
    %v1262 = vlaneseq
    %v1263 = vshrl.u32 %v1262, 7
    %v1264 = vsub.s32 2, %v1263
    %v1265 = vrot.slane %v1247, %v1264
    %1267 = vbcast.lane.b32.xlu0 %v1265, 256
    %v1268 = vpop.permute.xlu0 %1267
    %v1269 = vlaneseq
    %v1270 = vshrl.u32 %v1269, 7
    %v1271 = vsub.s32 3, %v1270
    %v1272 = vrot.slane %v1247, %v1271
    %1274 = vbcast.lane.b32.xlu0 %v1272, 256
    %v1275 = vpop.permute.xlu0 %1274
    %v1276 = vlaneseq
    %v1277 = vshrl.u32 %v1276, 7
    %v1278 = vsub.s32 4, %v1277
    %v1279 = vrot.slane %v1247, %v1278
    %1281 = vbcast.lane.b32.xlu0 %v1279, 256
    %v1282 = vpop.permute.xlu0 %1281
    %v1283 = vlaneseq
    %v1284 = vshrl.u32 %v1283, 7
    %v1285 = vsub.s32 5, %v1284
    %v1286 = vrot.slane %v1247, %v1285
    %1288 = vbcast.lane.b32.xlu0 %v1286, 256
    %v1289 = vpop.permute.xlu0 %1288
    %v1290 = vlaneseq
    %v1291 = vshrl.u32 %v1290, 7
    %v1292 = vsub.s32 6, %v1291
    %v1293 = vrot.slane %v1247, %v1292
    %1295 = vbcast.lane.b32.xlu0 %v1293, 256
    %v1296 = vpop.permute.xlu0 %1295
    %v1297 = vlaneseq
    %v1298 = vshrl.u32 %v1297, 7
    %v1299 = vsub.s32 7, %v1298
    %v1300 = vrot.slane %v1247, %v1299
    %1302 = vbcast.lane.b32.xlu0 %v1300, 256
    %v1303 = vpop.permute.xlu0 %1302
    %1305 = vbcast.lane.b32.xlu0 %v1251, 256
    %v1306 = vpop.permute.xlu0 %1305
    %1308 = vbcast.lane.b32.xlu0 %v1258, 256
    %v1309 = vpop.permute.xlu0 %1308
    %1311 = vbcast.lane.b32.xlu0 %v1265, 256
    %v1312 = vpop.permute.xlu0 %1311
    %1314 = vbcast.lane.b32.xlu0 %v1272, 256
    %v1315 = vpop.permute.xlu0 %1314
    %1317 = vbcast.lane.b32.xlu0 %v1279, 256
    %v1318 = vpop.permute.xlu0 %1317
    %1320 = vbcast.lane.b32.xlu0 %v1286, 256
    %v1321 = vpop.permute.xlu0 %1320
    %1323 = vbcast.lane.b32.xlu0 %v1293, 256
    %v1324 = vpop.permute.xlu0 %1323
    %1326 = vbcast.lane.b32.xlu0 %v1300, 256
    %v1327 = vpop.permute.xlu0 %1326
    %v1344 = vmul.f32 %v222, %v1254
    %v1345 = vmul.f32 %v222, %v1261
    %v1346 = vmul.f32 %v222, %v1268
    %v1347 = vmul.f32 %v222, %v1275
    %v1348 = vmul.f32 %v222, %v1282
    %v1349 = vmul.f32 %v222, %v1289
    %v1350 = vmul.f32 %v222, %v1296
    %v1351 = vmul.f32 %v222, %v1303
    %v1352 = vmul.f32 %v229, %v1306
    %v1353 = vmul.f32 %v229, %v1309
    %v1354 = vmul.f32 %v229, %v1312
    %v1355 = vmul.f32 %v229, %v1315
    %v1356 = vmul.f32 %v229, %v1318
    %v1357 = vmul.f32 %v229, %v1321
    %v1358 = vmul.f32 %v229, %v1324
    %v1359 = vmul.f32 %v229, %v1327
    %1376 = vset.pattern.permute.xlu0 0
    %1377 = vperm.xlu0 %1376, %v1344
    %v1378 = vpop.permute.xlu0 %1377
    %1379 = vset.pattern.permute.xlu0 0
    %1380 = vperm.xlu0 %1379, %v1345
    %v1381 = vpop.permute.xlu0 %1380
    %1382 = vset.pattern.permute.xlu0 0
    %1383 = vperm.xlu0 %1382, %v1346
    %v1384 = vpop.permute.xlu0 %1383
    %1385 = vset.pattern.permute.xlu0 0
    %1386 = vperm.xlu0 %1385, %v1347
    %v1387 = vpop.permute.xlu0 %1386
    %1388 = vset.pattern.permute.xlu0 0
    %1389 = vperm.xlu0 %1388, %v1348
    %v1390 = vpop.permute.xlu0 %1389
    %1391 = vset.pattern.permute.xlu0 0
    %1392 = vperm.xlu0 %1391, %v1349
    %v1393 = vpop.permute.xlu0 %1392
    %1394 = vset.pattern.permute.xlu0 0
    %1395 = vperm.xlu0 %1394, %v1350
    %v1396 = vpop.permute.xlu0 %1395
    %1397 = vset.pattern.permute.xlu0 0
    %1398 = vperm.xlu0 %1397, %v1351
    %v1399 = vpop.permute.xlu0 %1398
    %1400 = vset.pattern.permute.xlu0 0
    %1401 = vperm.xlu0 %1400, %v1352
    %v1402 = vpop.permute.xlu0 %1401
    %1403 = vset.pattern.permute.xlu0 0
    %1404 = vperm.xlu0 %1403, %v1353
    %v1405 = vpop.permute.xlu0 %1404
    %1406 = vset.pattern.permute.xlu0 0
    %1407 = vperm.xlu0 %1406, %v1354
    %v1408 = vpop.permute.xlu0 %1407
    %1409 = vset.pattern.permute.xlu0 0
    %1410 = vperm.xlu0 %1409, %v1355
    %v1411 = vpop.permute.xlu0 %1410
    %1412 = vset.pattern.permute.xlu0 0
    %1413 = vperm.xlu0 %1412, %v1356
    %v1414 = vpop.permute.xlu0 %1413
    %1415 = vset.pattern.permute.xlu0 0
    %1416 = vperm.xlu0 %1415, %v1357
    %v1417 = vpop.permute.xlu0 %1416
    %1418 = vset.pattern.permute.xlu0 0
    %1419 = vperm.xlu0 %1418, %v1358
    %v1420 = vpop.permute.xlu0 %1419
    %1421 = vset.pattern.permute.xlu0 0
    %1422 = vperm.xlu0 %1421, %v1359
    %v1423 = vpop.permute.xlu0 %1422
    %v1424 = vlaneseq
    %v1425 = vshrl.u32 %v1424, 7
    %v1426 = vsub.s32 %v160, %v1425
    %v1427 = vrot.slane %v1378, %v1426
    %v1428 = vlaneseq
    %v1429 = vshrl.u32 %v1428, 7
    %v1430 = vsub.s32 %v160, %v1429
    %v1431 = vrot.slane %v1381, %v1430
    %v1432 = vlaneseq
    %v1433 = vshrl.u32 %v1432, 7
    %v1434 = vsub.s32 %v160, %v1433
    %v1435 = vrot.slane %v1384, %v1434
    %v1436 = vlaneseq
    %v1437 = vshrl.u32 %v1436, 7
    %v1438 = vsub.s32 %v160, %v1437
    %v1439 = vrot.slane %v1387, %v1438
    %v1440 = vlaneseq
    %v1441 = vshrl.u32 %v1440, 7
    %v1442 = vsub.s32 %v160, %v1441
    %v1443 = vrot.slane %v1390, %v1442
    %v1444 = vlaneseq
    %v1445 = vshrl.u32 %v1444, 7
    %v1446 = vsub.s32 %v160, %v1445
    %v1447 = vrot.slane %v1393, %v1446
    %v1448 = vlaneseq
    %v1449 = vshrl.u32 %v1448, 7
    %v1450 = vsub.s32 %v160, %v1449
    %v1451 = vrot.slane %v1396, %v1450
    %v1452 = vlaneseq
    %v1453 = vshrl.u32 %v1452, 7
    %v1454 = vsub.s32 %v160, %v1453
    %v1455 = vrot.slane %v1399, %v1454
    %v1456 = vlaneseq
    %v1457 = vshrl.u32 %v1456, 7
    %v1458 = vsub.s32 %v160, %v1457
    %v1459 = vrot.slane %v1402, %v1458
    %v1460 = vlaneseq
    %v1461 = vshrl.u32 %v1460, 7
    %v1462 = vsub.s32 %v160, %v1461
    %v1463 = vrot.slane %v1405, %v1462
    %v1464 = vlaneseq
    %v1465 = vshrl.u32 %v1464, 7
    %v1466 = vsub.s32 %v160, %v1465
    %v1467 = vrot.slane %v1408, %v1466
    %v1468 = vlaneseq
    %v1469 = vshrl.u32 %v1468, 7
    %v1470 = vsub.s32 %v160, %v1469
    %v1471 = vrot.slane %v1411, %v1470
    %v1472 = vlaneseq
    %v1473 = vshrl.u32 %v1472, 7
    %v1474 = vsub.s32 %v160, %v1473
    %v1475 = vrot.slane %v1414, %v1474
    %v1476 = vlaneseq
    %v1477 = vshrl.u32 %v1476, 7
    %v1478 = vsub.s32 %v160, %v1477
    %v1479 = vrot.slane %v1417, %v1478
    %v1480 = vlaneseq
    %v1481 = vshrl.u32 %v1480, 7
    %v1482 = vsub.s32 %v160, %v1481
    %v1483 = vrot.slane %v1420, %v1482
    %v1484 = vlaneseq
    %v1485 = vshrl.u32 %v1484, 7
    %v1486 = vsub.s32 %v160, %v1485
    %v1487 = vrot.slane %v1423, %v1486
    %v1488 = vsel %vm193, %v1431, %v1427
    %v1489 = vsel %vm195, %v1435, %v1488
    %v1490 = vsel %vm197, %v1439, %v1489
    %v1491 = vsel %vm664, %v1443, %v1490
    %v1492 = vsel %vm666, %v1447, %v1491
    %v1493 = vsel %vm668, %v1451, %v1492
    %v1494 = vsel %vm670, %v1455, %v1493
    %v1495 = vsel %vm193, %v1463, %v1459
    %v1496 = vsel %vm195, %v1467, %v1495
    %v1497 = vsel %vm197, %v1471, %v1496
    %v1498 = vsel %vm664, %v1475, %v1497
    %v1499 = vsel %vm666, %v1479, %v1498
    %v1500 = vsel %vm668, %v1483, %v1499
    %v1501 = vsel %vm670, %v1487, %v1500
    %v1504 = vsel %vm681, %v1494, 0.0
    %1505 = vadd.xlane.f32.xlu0 %v1504
    %v1506 = vpop.xlane.xlu0 %1505
    %v1507 = vsel %vm681, %v1501, 0.0
    %1508 = vadd.xlane.f32.xlu0 %v1507
    %v1509 = vpop.xlane.xlu0 %1508
    %v1510 = vadd.f32 %v1241, %v1506
    %v1511 = vadd.f32 %v1242, %v1509
    %v1512 = vld [vmem:[%s6] sm:$0x1]
    %v1514 = vlaneseq
    %v1515 = vshrl.u32 %v1514, 7
    %v1516 = vsub.s32 0, %v1515
    %v1517 = vrot.slane %v1512, %v1516
    %1519 = vbcast.lane.b32.xlu0 %v1517, 256
    %v1520 = vpop.permute.xlu0 %1519
    %v1522 = vadd.f32 %v1510, %v1520
    %v1523 = vadd.f32 %v1511, %v1520
    %v1524 = vmax.f32 %v1522, 0.0
    %v1525 = vmax.f32 %v1523, 0.0
    %v1526 = vld [vmem:[%s7] sm:$0xf]
    %v1528 = vlaneseq
    %v1529 = vshrl.u32 %v1528, 7
    %v1530 = vsub.s32 0, %v1529
    %v1531 = vrot.slane %v1526, %v1530
    %1533 = vbcast.lane.b32.xlu0 %v1531, 256
    %v1534 = vpop.permute.xlu0 %1533
    %v1535 = vlaneseq
    %v1536 = vshrl.u32 %v1535, 7
    %v1537 = vsub.s32 1, %v1536
    %v1538 = vrot.slane %v1526, %v1537
    %1540 = vbcast.lane.b32.xlu0 %v1538, 256
    %v1541 = vpop.permute.xlu0 %1540
    %v1542 = vlaneseq
    %v1543 = vshrl.u32 %v1542, 7
    %v1544 = vsub.s32 2, %v1543
    %v1545 = vrot.slane %v1526, %v1544
    %1547 = vbcast.lane.b32.xlu0 %v1545, 256
    %v1548 = vpop.permute.xlu0 %1547
    %v1549 = vlaneseq
    %v1550 = vshrl.u32 %v1549, 7
    %v1551 = vsub.s32 3, %v1550
    %v1552 = vrot.slane %v1526, %v1551
    %1554 = vbcast.lane.b32.xlu0 %v1552, 256
    %v1555 = vpop.permute.xlu0 %1554
    %v1560 = vmul.f32 %v1524, %v1534
    %v1561 = vmul.f32 %v1524, %v1541
    %v1562 = vmul.f32 %v1524, %v1548
    %v1563 = vmul.f32 %v1524, %v1555
    %v1564 = vmul.f32 %v1525, %v1534
    %v1565 = vmul.f32 %v1525, %v1541
    %v1566 = vmul.f32 %v1525, %v1548
    %v1567 = vmul.f32 %v1525, %v1555
    %1576 = vset.pattern.permute.xlu0 0
    %1577 = vperm.xlu0 %1576, %v1560
    %v1578 = vpop.permute.xlu0 %1577
    %1579 = vset.pattern.permute.xlu0 0
    %1580 = vperm.xlu0 %1579, %v1561
    %v1581 = vpop.permute.xlu0 %1580
    %1582 = vset.pattern.permute.xlu0 0
    %1583 = vperm.xlu0 %1582, %v1562
    %v1584 = vpop.permute.xlu0 %1583
    %1585 = vset.pattern.permute.xlu0 0
    %1586 = vperm.xlu0 %1585, %v1563
    %v1587 = vpop.permute.xlu0 %1586
    %1588 = vset.pattern.permute.xlu0 0
    %1589 = vperm.xlu0 %1588, %v1564
    %v1590 = vpop.permute.xlu0 %1589
    %1591 = vset.pattern.permute.xlu0 0
    %1592 = vperm.xlu0 %1591, %v1565
    %v1593 = vpop.permute.xlu0 %1592
    %1594 = vset.pattern.permute.xlu0 0
    %1595 = vperm.xlu0 %1594, %v1566
    %v1596 = vpop.permute.xlu0 %1595
    %1597 = vset.pattern.permute.xlu0 0
    %1598 = vperm.xlu0 %1597, %v1567
    %v1599 = vpop.permute.xlu0 %1598
    %v1600 = vlaneseq
    %v1601 = vshrl.u32 %v1600, 7
    %v1602 = vsub.s32 %v160, %v1601
    %v1603 = vrot.slane %v1578, %v1602
    %v1604 = vlaneseq
    %v1605 = vshrl.u32 %v1604, 7
    %v1606 = vsub.s32 %v160, %v1605
    %v1607 = vrot.slane %v1581, %v1606
    %v1608 = vlaneseq
    %v1609 = vshrl.u32 %v1608, 7
    %v1610 = vsub.s32 %v160, %v1609
    %v1611 = vrot.slane %v1584, %v1610
    %v1612 = vlaneseq
    %v1613 = vshrl.u32 %v1612, 7
    %v1614 = vsub.s32 %v160, %v1613
    %v1615 = vrot.slane %v1587, %v1614
    %v1616 = vlaneseq
    %v1617 = vshrl.u32 %v1616, 7
    %v1618 = vsub.s32 %v160, %v1617
    %v1619 = vrot.slane %v1590, %v1618
    %v1620 = vlaneseq
    %v1621 = vshrl.u32 %v1620, 7
    %v1622 = vsub.s32 %v160, %v1621
    %v1623 = vrot.slane %v1593, %v1622
    %v1624 = vlaneseq
    %v1625 = vshrl.u32 %v1624, 7
    %v1626 = vsub.s32 %v160, %v1625
    %v1627 = vrot.slane %v1596, %v1626
    %v1628 = vlaneseq
    %v1629 = vshrl.u32 %v1628, 7
    %v1630 = vsub.s32 %v160, %v1629
    %v1631 = vrot.slane %v1599, %v1630
    %v1632 = vsel %vm193, %v1607, %v1603
    %v1633 = vsel %vm195, %v1611, %v1632
    %v1634 = vsel %vm197, %v1615, %v1633
    %v1635 = vsel %vm193, %v1623, %v1619
    %v1636 = vsel %vm195, %v1627, %v1635
    %v1637 = vsel %vm197, %v1631, %v1636
    %vm1640 = vcmask 60416
    %v1641 = vsel %vm1640, %v1634, 0.0
    %1642 = vadd.xlane.f32.xlu0 %v1641
    %v1643 = vpop.xlane.xlu0 %1642
    %v1644 = vsel %vm1640, %v1637, 0.0
    %1645 = vadd.xlane.f32.xlu0 %v1644
    %v1646 = vpop.xlane.xlu0 %1645
    %v1647 = vld [vmem:[%s8] sm:$0x1]
    %v1649 = vlaneseq
    %v1650 = vshrl.u32 %v1649, 7
    %v1651 = vsub.s32 0, %v1650
    %v1652 = vrot.slane %v1647, %v1651
    %1654 = vbcast.lane.b32.xlu0 %v1652, 256
    %v1655 = vpop.permute.xlu0 %1654
    %v1657 = vadd.f32 %v1643, %v1655
    %v1658 = vadd.f32 %v1646, %v1655
    %v1659 = vtanh.pop %v1657
    %v1660 = vtanh.pop %v1658
    %v1661 = vmax.f32 %v1659, 0.0
    %v1662 = vmax.f32 %v1660, 0.0
    %1665 = vset.pattern.permute.xlu0 0
    %1666 = vperm.xlu0 %1665, %v1661
    %v1667 = vpop.permute.xlu0 %1666
    %1668 = vset.pattern.permute.xlu0 0
    %1669 = vperm.xlu0 %1668, %v1662
    %v1670 = vpop.permute.xlu0 %1669
    %v1671 = vlaneseq
    %v1672 = vshrl.u32 %v1671, 7
    %v1673 = vsub.s32 %v160, %v1672
    %v1674 = vrot.slane %v1667, %v1673
    %v1675 = vlaneseq
    %v1676 = vshrl.u32 %v1675, 7
    %v1677 = vsub.s32 %v160, %v1676
    %v1678 = vrot.slane %v1670, %v1677
    %v1679 = vsel %vm193, %v1678, %v1674
    %vm1681 = vcmask 25600
    %1682 = vst.msk [vmem:[#allocation8] sm:$0x3] %vm1681, %v1679
    // Predicated region
    $region42: #{tpu_custom_call.1} parent=1 // pred_check
      _
    $region43: #{tpu_custom_call.1} parent=1 // pred_check_branch
      %1684 = sbr.rel (0) target = $region45
    $region44: #{tpu_custom_call.1} parent=1 // pred_region
      %s1686 = ssub.s32 256, 256
      %1687 = vsyncadd [#allocation3], %s1686
      %s1689 = sshll.u32 [#allocation5], 4
      %s1690 = int_to_ptr.vmem [resolvable:$true] %s1689
      %1692 = dma.vmem_to_hbm [thread:$0]  %s1690, 256, %s9, [#allocation3]
    $region45: #{tpu_custom_call.1} parent=1 // pred_fallthru
      _
    // Predicated region
    $region46: #{tpu_custom_call.1} parent=1 // pred_check
      _
    $region47: #{tpu_custom_call.1} parent=1 // pred_check_branch
      %1694 = sbr.rel (0) target = $region49
    $region48: #{tpu_custom_call.1} parent=1 // pred_region
      %s1696 = ssub.s32 256, 256
      %1697 = vsyncadd [#allocation7], %s1696
      %s1699 = sshll.u32 [#allocation6], 4
      %s1700 = int_to_ptr.vmem [resolvable:$true] %s1699
      %1702 = dma.vmem_to_hbm [thread:$0]  %s1700, 256, %s10, [#allocation7]
    $region49: #{tpu_custom_call.1} parent=1 // pred_fallthru
      _
    // Predicated region
    $region50: #{tpu_custom_call.1} parent=1 // pred_check
      _
    $region51: #{tpu_custom_call.1} parent=1 // pred_check_branch
      %1704 = sbr.rel (0) target = $region53
    $region52: #{tpu_custom_call.1} parent=1 // pred_region
      %s1706 = ssub.s32 32, 32
      %1707 = vsyncadd [#allocation7], %s1706
      %s1709 = sshll.u32 [#allocation8], 4
      %s1710 = int_to_ptr.vmem [resolvable:$true] %s1709
      %1712 = dma.vmem_to_hbm [thread:$0]  %s1710, 32, %s11, [#allocation7]
    $region53: #{tpu_custom_call.1} parent=1 // pred_fallthru
      _
    // Predicated region
    $region54: #{tpu_custom_call.1} parent=1 // pred_check
      _
    $region55: #{tpu_custom_call.1} parent=1 // pred_check_branch
      %1714 = sbr.rel (0) target = $region57
    $region56: #{tpu_custom_call.1} parent=1 // pred_region
      %1715 = dma.done [#allocation3], 256
    $region57: #{tpu_custom_call.1} parent=1 // pred_fallthru
      _
    // Predicated region
    $region58: #{tpu_custom_call.1} parent=1 // pred_check
      _
    $region59: #{tpu_custom_call.1} parent=1 // pred_check_branch
      %1717 = sbr.rel (0) target = $region61
    $region60: #{tpu_custom_call.1} parent=1 // pred_region
      %1718 = dma.done [#allocation7], 256
    $region61: #{tpu_custom_call.1} parent=1 // pred_fallthru
      _
    // Predicated region
    $region62: #{tpu_custom_call.1} parent=1 // pred_check
      _
    $region63: #{tpu_custom_call.1} parent=1 // pred_check_branch
      %1720 = sbr.rel (0) target = $region65
    $region64: #{tpu_custom_call.1} parent=1 // pred_region
      %1721 = dma.done [#allocation7], 32
    $region65: #{tpu_custom_call.1} parent=1 // pred_fallthru
      _
    %1722 = vsyncpa [#allocation3], 1
    %1723 = vsyncpa [#allocation7], 1
    %1724 = vsyncpa [#allocation4], 1

</llo_original>
